<compile_context>
chip_gen: v7x
topology: tpu7x:2x2x1
jax: 0.10.0
libtpu: 0.0.40
codegen_flags: <defaults>
</compile_context>

<pallas_src>
import functools

import jax
import jax.numpy as jnp
from jax.experimental import pallas as pl
from jax.experimental.pallas import tpu as pltpu

_WPAD = 16  # halo offset along W inside the VMEM scratch; multiple of the bf16 (16,128) sublane tile


def _vmem_limit_bytes():
    """Generation-gated VMEM budget: ~3/4 of physical (v5e/v6e 128 MiB -> 96, v7x 64 MiB -> 48)."""
    try:
        cap = int(pltpu.get_tpu_info().vmem_capacity_bytes)
    except Exception:
        cap = 64 * 1024 * 1024  # conservative fallback (v7x-sized)
    return (cap // 4) * 3


def _row_tile(m, target=4096):
    """Largest row tile <= target that divides m and is a multiple of 16 (bf16 sublane packing)."""
    if m <= target:
        return m
    t = target - target % 16
    while t >= 16:
        if m % t == 0:
            return t
        t -= 16
    return m


def _conv_silu_stats_kernel(x_ref, w_ref, b_ref, y_ref, sum_ref, ssq_ref, *scratch,
                            ks, fuse_taps):
    """One (image, Cout-tile) per grid step: conv + bias + SiLU + BN partial sums.

    x_ref   : (1, H, W, Cin)        bf16  unpadded NHWC image tile (same block across Cout tiles)
    w_ref   : (ks*ks*Cin, TCO) bf16 if fuse_taps else (ks*ks, Cin, TCO) bf16
    b_ref   : (1, TCO)              f32   conv bias (lane-padded)
    y_ref   : (1, H*W, TCO)         bf16  conv+SiLU activations (pre-BN)
    sum_ref : (1, 1, TCO)           f32   per-tile sum(y)   over H*W
    ssq_ref : (1, 1, TCO)           f32   per-tile sum(y*y) over H*W
    scratch : ks>1 -> halo scratch (H+2p, W+2*_WPAD, Cin) [+ im2col scratch (H*W, ks*ks*Cin) bf16]
    """
    _, H, W, Cin = x_ref.shape
    HW = H * W
    pad = (ks - 1) // 2

    if ks > 1:
        xp_ref = scratch[0]
        col_ref = scratch[1] if fuse_taps else None

        # Halo + im2col are a function of the image only: build once per image (co tile 0) and
        # reuse across the Cout-tile axis (marked "arbitrary", so it is never split across cores).
        @pl.when(pl.program_id(1) == 0)
        def _build():
            # Zero only the halo strips; the interior store below never dirties them.  All strip
            # offsets/widths are multiples of the bf16 sublane-pair, so every store is unmasked
            # at packing granularity.
            xp_ref[0:pad, :, :] = jnp.zeros((pad,) + xp_ref.shape[1:], xp_ref.dtype)
            xp_ref[pad + H:2 * pad + H, :, :] = jnp.zeros((pad,) + xp_ref.shape[1:], xp_ref.dtype)
            xp_ref[:, 0:_WPAD, :] = jnp.zeros((xp_ref.shape[0], _WPAD, Cin), xp_ref.dtype)
            xp_ref[:, _WPAD + W:2 * _WPAD + W, :] = (
                jnp.zeros((xp_ref.shape[0], _WPAD, Cin), xp_ref.dtype))
            # Interior store at a sublane-aligned W offset (no padded HBM copy, no f32 round trip).
            xp_ref[pad:pad + H, _WPAD:_WPAD + W, :] = x_ref[0].astype(xp_ref.dtype)
            if fuse_taps:
                # Persistent bf16 im2col: one window copy per tap, no concat temporaries, no cast
                # pass per kh.  Columns ordered (kh, kw, cin) to match the flattened weight.
                for kh in range(ks):
                    for kw in range(ks):
                        j0 = (kh * ks + kw) * Cin
                        win = xp_ref[kh:kh + H, _WPAD + kw - pad:_WPAD + kw - pad + W, :]
                        col_ref[:, j0:j0 + Cin] = win.reshape(HW, Cin).astype(col_ref.dtype)

        if fuse_taps:
            # Single fat dot: K = ks*ks*Cin (fills the MXU even for the small-Cin stem).
            acc = jnp.dot(col_ref[...], w_ref[...], preferred_element_type=jnp.float32)
        else:
            # Cin >= 128 already fills the MXU depth: ks*ks dots with K = Cin, no im2col copies.
            acc = None
            for kh in range(ks):
                for kw in range(ks):
                    win = xp_ref[kh:kh + H, _WPAD + kw - pad:_WPAD + kw - pad + W, :]
                    part = jnp.dot(win.reshape(HW, Cin).astype(jnp.bfloat16),
                                   w_ref[kh * ks + kw], preferred_element_type=jnp.float32)
                    acc = part if acc is None else acc + part
    else:
        # 1x1 conv: no halo, no im2col — a single matmul per (image, Cout tile).
        acc = jnp.dot(x_ref[0].reshape(HW, Cin), w_ref[...], preferred_element_type=jnp.float32)

    acc = acc + b_ref[...]                                                     # conv bias
    # SiLU: x * sigmoid(x); exp and the approximate reciprocal both run on the EUP slot.
    y = acc * pl.reciprocal(1.0 + jnp.exp(-acc), approx=True)

    y_ref[0] = y.astype(y_ref.dtype)                                           # bf16 activation
    # Single-pass BatchNorm statistics in f32 (cross-tile reduction done in the wrapper).
    sum_ref[0] = jnp.sum(y, axis=0, keepdims=True)
    ssq_ref[0] = jnp.sum(y * y, axis=0, keepdims=True)


def _bn_apply_kernel(y_ref, scale_ref, shift_ref, o_ref):
    # (y - mean) * rsqrt(var + eps) * gamma + beta, folded into y * scale + shift.
    o_ref[...] = y_ref[...].astype(jnp.float32) * scale_ref[...] + shift_ref[...]


def conv_layer_forward(x_nchw, w_oihw, bias, gamma, beta, *, ks=3, stride=1, eps=1e-5):
    """ConvLayer forward (NCHW in / NCHW out), matching the torch module in training mode."""
    # TODO(synk): stride > 1 (ResNet stem / downsampling blocks) is not implemented.
    assert stride == 1, "stride > 1 not implemented in the Pallas kernel"
    assert ks % 2 == 1 and (ks - 1) // 2 <= _WPAD
    N, Cin, H, W = x_nchw.shape
    Cout = w_oihw.shape[0]
    pad = (ks - 1) // 2
    HW = H * W
    Cp = ((Cout + 127) // 128) * 128            # lane-dense output channel count
    TCO = 256 if Cp % 256 == 0 else Cp          # Cout tile: 256-wide MXU on v6e/v7x when possible
    n_co = Cp // TCO
    fuse_taps = (ks == 1) or (Cin < 128)        # fat K=ks*ks*Cin dot for small Cin, per-tap else

    # NCHW -> NHWC, bf16 (half the HBM read, full-rate MXU inputs).  The halo is built in-kernel,
    # so this is the single layout copy at the module boundary.
    # TODO(synk): keep NHWC/Cp layout between chained layers and only transpose at network edges.
    x_nhwc = jnp.transpose(x_nchw, (0, 2, 3, 1)).astype(jnp.bfloat16)

    # (Cout, Cin, kh, kw) -> (kh, kw, Cin, Cout), Cout zero-padded to the lane-dense width.
    w_t = jnp.transpose(w_oihw, (2, 3, 1, 0))
    if fuse_taps:
        w_p = jnp.pad(w_t.reshape(ks * ks * Cin, Cout),
                      ((0, 0), (0, Cp - Cout))).astype(jnp.bfloat16)
        w_spec = pl.BlockSpec((ks * ks * Cin, TCO), lambda n, c: (0, c))
    else:
        w_p = jnp.pad(w_t.reshape(ks * ks, Cin, Cout),
                      ((0, 0), (0, 0), (0, Cp - Cout))).astype(jnp.bfloat16)
        w_spec = pl.BlockSpec((ks * ks, Cin, TCO), lambda n, c: (0, 0, c))
    b_p = jnp.pad(bias, (0, Cp - Cout)).astype(jnp.float32).reshape(1, Cp)

    # bf16 halo scratch when the interior width keeps every strip store pair-aligned; otherwise
    # fall back to f32 (odd W — rare) where arbitrary sublane offsets are always legal.
    halo_dtype = jnp.bfloat16 if W % 2 == 0 else jnp.float32
    scratch = []
    if ks > 1:
        scratch.append(pltpu.VMEM((H + 2 * pad, W + 2 * _WPAD, Cin), halo_dtype))
        if fuse_taps:
            scratch.append(pltpu.VMEM((HW, ks * ks * Cin), jnp.bfloat16))

    vlim = _vmem_limit_bytes()

    # ---- Pass 1: conv + SiLU + per-tile BN partial sums --------------------------------------
    # grid = (batch, Cout tiles): batch is "parallel" (megacore split), the Cout/reuse axis is
    # "arbitrary" so the per-image halo/im2col scratch built at co==0 is never split across cores.
    y, psum, psq = pl.pallas_call(
        functools.partial(_conv_silu_stats_kernel, ks=ks, fuse_taps=fuse_taps),
        out_shape=(
            jax.ShapeDtypeStruct((N, HW, Cp), jnp.bfloat16),   # y stored bf16 (halves HBM traffic)
            jax.ShapeDtypeStruct((N, 1, Cp), jnp.float32),
            jax.ShapeDtypeStruct((N, 1, Cp), jnp.float32),
        ),
        grid=(N, n_co),
        in_specs=[
            pl.BlockSpec((1, H, W, Cin), lambda n, c: (n, 0, 0, 0)),
            w_spec,
            pl.BlockSpec((1, TCO), lambda n, c: (0, c)),
        ],
        out_specs=(
            pl.BlockSpec((1, HW, TCO), lambda n, c: (n, 0, c)),
            pl.BlockSpec((1, 1, TCO), lambda n, c: (n, 0, c)),
            pl.BlockSpec((1, 1, TCO), lambda n, c: (n, 0, c)),
        ),
        scratch_shapes=scratch,
        compiler_params=pltpu.CompilerParams(
            dimension_semantics=("parallel", "arbitrary"),
            vmem_limit_bytes=vlim,
        ),
    )(x_nhwc, w_p, b_p)

    # Global N*H*W BatchNorm statistics (training mode), folded into a per-channel affine.
    cnt = float(N * HW)
    mean = jnp.sum(psum[:, 0, :], axis=0) / cnt
    ex2 = jnp.sum(psq[:, 0, :], axis=0) / cnt
    var = jnp.maximum(ex2 - mean * mean, 0.0)
    g_p = jnp.pad(gamma, (0, Cp - Cout)).astype(jnp.float32)
    beta_p = jnp.pad(beta, (0, Cp - Cout)).astype(jnp.float32)
    scale_v = g_p * jax.lax.rsqrt(var + eps)
    shift_v = beta_p - mean * scale_v

    # ---- Pass 2: apply the folded BN affine over a flattened, large-row-tile view -------------
    # TODO(synk): with chained ConvLayers this pass disappears into the next layer's prologue.
    M = N * HW
    TR = _row_tile(M)
    out = pl.pallas_call(
        _bn_apply_kernel,
        out_shape=jax.ShapeDtypeStruct((M, Cp), jnp.float32),
        grid=(M // TR,),
        in_specs=[
            pl.BlockSpec((TR, Cp), lambda i: (i, 0)),
            pl.BlockSpec((1, Cp), lambda i: (0, 0)),
            pl.BlockSpec((1, Cp), lambda i: (0, 0)),
        ],
        out_specs=pl.BlockSpec((TR, Cp), lambda i: (i, 0)),
        compiler_params=pltpu.CompilerParams(
            dimension_semantics=("parallel",),
            vmem_limit_bytes=vlim,
        ),
    )(y.reshape(M, Cp), scale_v.reshape(1, Cp), shift_v.reshape(1, Cp))

    out = out[:, :Cout].reshape(N, H, W, Cout)        # drop the lane padding
    return jnp.transpose(out, (0, 3, 1, 2))           # back to NCHW


def _reference(x, w, b, g, beta, eps=1e-5):
    # Same math as nn.Sequential(Conv2d, SiLU, BatchNorm2d) in training mode; conv inputs rounded
    # to bf16 exactly like the kernel feeds the MXU (accumulation stays f32).
    xq = x.astype(jnp.bfloat16).astype(jnp.float32)
    wq = w.astype(jnp.bfloat16).astype(jnp.float32)
    p = (w.shape[-1] - 1) // 2
    y = jax.lax.conv_general_dilated(
        xq, wq, window_strides=(1, 1), padding=((p, p), (p, p)),
        dimension_numbers=("NCHW", "OIHW", "NCHW"))
    y = y + b[None, :, None, None]
    y = y * jax.nn.sigmoid(y)
    mean = jnp.mean(y, axis=(0, 2, 3), keepdims=True)
    var = jnp.mean((y - mean) ** 2, axis=(0, 2, 3), keepdims=True)
    return (y - mean) * jax.lax.rsqrt(var + eps) * g[None, :, None, None] \
        + beta[None, :, None, None]


if __name__ == "__main__":
    N, Cin, Cout, H, W, ks = 2, 4, 8, 16, 16, 3

    key = jax.random.PRNGKey(0)
    kx, kw, kb, kg, kbt = jax.random.split(key, 5)
    x = jax.random.normal(kx, (N, Cin, H, W), jnp.float32)
    w = 0.1 * jax.random.normal(kw, (Cout, Cin, ks, ks), jnp.float32)
    b = 0.1 * jax.random.normal(kb, (Cout,), jnp.float32)
    gamma = 1.0 + 0.1 * jax.random.normal(kg, (Cout,), jnp.float32)
    beta = 0.1 * jax.random.normal(kbt, (Cout,), jnp.float32)

    out = conv_layer_forward(x, w, b, gamma, beta, ks=ks, stride=1)
    out = jax.block_until_ready(out)
    assert out.shape == (N, Cout, H, W)

    ref = jax.block_until_ready(_reference(x, w, b, gamma, beta))
    max_err = float(jnp.max(jnp.abs(out - ref)))
    assert jnp.allclose(out, ref, rtol=2e-2, atol=2e-2), f"max abs err = {max_err}"

    print("KERNEL_OK")
</pallas_src>

<mosaic_0001>
module attributes {stable_mosaic.version = 11 : i64} {
  func.func @_conv_silu_stats_kernel(%arg0: i32, %arg1: i32, %arg2: memref<1x16x16x4xbf16, #tpu.memory_space<vmem>>, %arg3: memref<36x128xbf16, #tpu.memory_space<vmem>>, %arg4: memref<1x128xf32, #tpu.memory_space<vmem>>, %arg5: memref<1x256x128xbf16, #tpu.memory_space<vmem>>, %arg6: memref<1x1x128xf32, #tpu.memory_space<vmem>>, %arg7: memref<1x1x128xf32, #tpu.memory_space<vmem>>, %arg8: memref<18x48x4xbf16, #tpu.memory_space<vmem>>, %arg9: memref<256x36xbf16, #tpu.memory_space<vmem>>) attributes {dimension_semantics = [#tpu.dimension_semantics<parallel>, #tpu.dimension_semantics<arbitrary>], iteration_bounds = array<i64: 2, 1>, scalar_prefetch = 0 : i64, scratch_operands = 2 : i64, tpu.core_type = #tpu.core_type<tc>, window_params = [{transform_indices = @transform_0, window_bounds = array<i64: 1, 16, 16, 4>}, {transform_indices = @transform_1, window_bounds = array<i64: 36, 128>}, {transform_indices = @transform_2, window_bounds = array<i64: 1, 128>}, {transform_indices = @transform_3, window_bounds = array<i64: 1, 256, 128>}, {transform_indices = @transform_4, window_bounds = array<i64: 1, 1, 128>}, {transform_indices = @transform_5, window_bounds = array<i64: 1, 1, 128>}]} {
    %c0_i32 = arith.constant 0 : i32
    %0 = arith.cmpi eq, %arg1, %c0_i32 : i32
    %1 = arith.extui %0 : i1 to i32
    %c0_i32_0 = arith.constant 0 : i32
    %2 = arith.cmpi ne, %1, %c0_i32_0 : i32
    scf.if %2 {
      %cst_19 = arith.constant 0.000000e+00 : bf16
      %31 = vector.broadcast %cst_19 : bf16 to vector<1x48x4xbf16>
      %c0_20 = arith.constant 0 : index
      %c0_21 = arith.constant 0 : index
      %c0_22 = arith.constant 0 : index
      %32 = vector.load %arg8[%c0_20, %c0_21, %c0_22] : memref<18x48x4xbf16, #tpu.memory_space<vmem>>, vector<1x48x4xbf16>
      tpu.vector_store %arg8[%c0_20, %c0_21, %c0_22], %31 {strides = array<i32>} : memref<18x48x4xbf16, #tpu.memory_space<vmem>>, vector<1x48x4xbf16>,
      %cst_23 = arith.constant 0.000000e+00 : bf16
      %33 = vector.broadcast %cst_23 : bf16 to vector<1x48x4xbf16>
      %c17 = arith.constant 17 : index
      %c0_24 = arith.constant 0 : index
      %c0_25 = arith.constant 0 : index
      %34 = vector.load %arg8[%c17, %c0_24, %c0_25] : memref<18x48x4xbf16, #tpu.memory_space<vmem>>, vector<1x48x4xbf16>
      tpu.vector_store %arg8[%c17, %c0_24, %c0_25], %33 {strides = array<i32>} : memref<18x48x4xbf16, #tpu.memory_space<vmem>>, vector<1x48x4xbf16>,
      %cst_26 = arith.constant 0.000000e+00 : bf16
      %35 = vector.broadcast %cst_26 : bf16 to vector<18x16x4xbf16>
      %c0_27 = arith.constant 0 : index
      %c0_28 = arith.constant 0 : index
      %c0_29 = arith.constant 0 : index
      %36 = vector.load %arg8[%c0_27, %c0_28, %c0_29] : memref<18x48x4xbf16, #tpu.memory_space<vmem>>, vector<18x16x4xbf16>
      tpu.vector_store %arg8[%c0_27, %c0_28, %c0_29], %35 {strides = array<i32>} : memref<18x48x4xbf16, #tpu.memory_space<vmem>>, vector<18x16x4xbf16>,
      %cst_30 = arith.constant 0.000000e+00 : bf16
      %37 = vector.broadcast %cst_30 : bf16 to vector<18x16x4xbf16>
      %c0_31 = arith.constant 0 : index
      %c32 = arith.constant 32 : index
      %c0_32 = arith.constant 0 : index
      %38 = vector.load %arg8[%c0_31, %c32, %c0_32] : memref<18x48x4xbf16, #tpu.memory_space<vmem>>, vector<18x16x4xbf16>
      tpu.vector_store %arg8[%c0_31, %c32, %c0_32], %37 {strides = array<i32>} : memref<18x48x4xbf16, #tpu.memory_space<vmem>>, vector<18x16x4xbf16>,
      %c0_33 = arith.constant 0 : index
      %c0_34 = arith.constant 0 : index
      %c0_35 = arith.constant 0 : index
      %c0_36 = arith.constant 0 : index
      %39 = vector.load %arg2[%c0_33, %c0_34, %c0_35, %c0_36] : memref<1x16x16x4xbf16, #tpu.memory_space<vmem>>, vector<1x16x16x4xbf16>
      %40 = vector.shape_cast %39 : vector<1x16x16x4xbf16> to vector<16x16x4xbf16>
      %c1 = arith.constant 1 : index
      %c16 = arith.constant 16 : index
      %c0_37 = arith.constant 0 : index
      %41 = vector.load %arg8[%c1, %c16, %c0_37] : memref<18x48x4xbf16, #tpu.memory_space<vmem>>, vector<16x16x4xbf16>
      tpu.vector_store %arg8[%c1, %c16, %c0_37], %40 {strides = array<i32>} : memref<18x48x4xbf16, #tpu.memory_space<vmem>>, vector<16x16x4xbf16>,
      %c0_38 = arith.constant 0 : index
      %c15 = arith.constant 15 : index
      %c0_39 = arith.constant 0 : index
      %42 = vector.load %arg8[%c0_38, %c15, %c0_39] : memref<18x48x4xbf16, #tpu.memory_space<vmem>>, vector<16x16x4xbf16>
      %43 = vector.shape_cast %42 : vector<16x16x4xbf16> to vector<256x4xbf16>
      %c0_40 = arith.constant 0 : index
      %c0_41 = arith.constant 0 : index
      %44 = vector.load %arg9[%c0_40, %c0_41] : memref<256x36xbf16, #tpu.memory_space<vmem>>, vector<256x4xbf16>
      tpu.vector_store %arg9[%c0_40, %c0_41], %43 {strides = array<i32>} : memref<256x36xbf16, #tpu.memory_space<vmem>>, vector<256x4xbf16>,
      %c0_42 = arith.constant 0 : index
      %c16_43 = arith.constant 16 : index
      %c0_44 = arith.constant 0 : index
      %45 = vector.load %arg8[%c0_42, %c16_43, %c0_44] : memref<18x48x4xbf16, #tpu.memory_space<vmem>>, vector<16x16x4xbf16>
      %46 = vector.shape_cast %45 : vector<16x16x4xbf16> to vector<256x4xbf16>
      %c0_45 = arith.constant 0 : index
      %c4 = arith.constant 4 : index
      %47 = vector.load %arg9[%c0_45, %c4] : memref<256x36xbf16, #tpu.memory_space<vmem>>, vector<256x4xbf16>
      tpu.vector_store %arg9[%c0_45, %c4], %46 {strides = array<i32>} : memref<256x36xbf16, #tpu.memory_space<vmem>>, vector<256x4xbf16>,
      %c0_46 = arith.constant 0 : index
      %c17_47 = arith.constant 17 : index
      %c0_48 = arith.constant 0 : index
      %48 = vector.load %arg8[%c0_46, %c17_47, %c0_48] : memref<18x48x4xbf16, #tpu.memory_space<vmem>>, vector<16x16x4xbf16>
      %49 = vector.shape_cast %48 : vector<16x16x4xbf16> to vector<256x4xbf16>
      %c0_49 = arith.constant 0 : index
      %c8 = arith.constant 8 : index
      %50 = vector.load %arg9[%c0_49, %c8] : memref<256x36xbf16, #tpu.memory_space<vmem>>, vector<256x4xbf16>
      tpu.vector_store %arg9[%c0_49, %c8], %49 {strides = array<i32>} : memref<256x36xbf16, #tpu.memory_space<vmem>>, vector<256x4xbf16>,
      %c1_50 = arith.constant 1 : index
      %c15_51 = arith.constant 15 : index
      %c0_52 = arith.constant 0 : index
      %51 = vector.load %arg8[%c1_50, %c15_51, %c0_52] : memref<18x48x4xbf16, #tpu.memory_space<vmem>>, vector<16x16x4xbf16>
      %52 = vector.shape_cast %51 : vector<16x16x4xbf16> to vector<256x4xbf16>
      %c0_53 = arith.constant 0 : index
      %c12 = arith.constant 12 : index
      %53 = vector.load %arg9[%c0_53, %c12] : memref<256x36xbf16, #tpu.memory_space<vmem>>, vector<256x4xbf16>
      tpu.vector_store %arg9[%c0_53, %c12], %52 {strides = array<i32>} : memref<256x36xbf16, #tpu.memory_space<vmem>>, vector<256x4xbf16>,
      %c1_54 = arith.constant 1 : index
      %c16_55 = arith.constant 16 : index
      %c0_56 = arith.constant 0 : index
      %54 = vector.load %arg8[%c1_54, %c16_55, %c0_56] : memref<18x48x4xbf16, #tpu.memory_space<vmem>>, vector<16x16x4xbf16>
      %55 = vector.shape_cast %54 : vector<16x16x4xbf16> to vector<256x4xbf16>
      %c0_57 = arith.constant 0 : index
      %c16_58 = arith.constant 16 : index
      %56 = vector.load %arg9[%c0_57, %c16_58] : memref<256x36xbf16, #tpu.memory_space<vmem>>, vector<256x4xbf16>
      tpu.vector_store %arg9[%c0_57, %c16_58], %55 {strides = array<i32>} : memref<256x36xbf16, #tpu.memory_space<vmem>>, vector<256x4xbf16>,
      %c1_59 = arith.constant 1 : index
      %c17_60 = arith.constant 17 : index
      %c0_61 = arith.constant 0 : index
      %57 = vector.load %arg8[%c1_59, %c17_60, %c0_61] : memref<18x48x4xbf16, #tpu.memory_space<vmem>>, vector<16x16x4xbf16>
      %58 = vector.shape_cast %57 : vector<16x16x4xbf16> to vector<256x4xbf16>
      %c0_62 = arith.constant 0 : index
      %c20 = arith.constant 20 : index
      %59 = vector.load %arg9[%c0_62, %c20] : memref<256x36xbf16, #tpu.memory_space<vmem>>, vector<256x4xbf16>
      tpu.vector_store %arg9[%c0_62, %c20], %58 {strides = array<i32>} : memref<256x36xbf16, #tpu.memory_space<vmem>>, vector<256x4xbf16>,
      %c2 = arith.constant 2 : index
      %c15_63 = arith.constant 15 : index
      %c0_64 = arith.constant 0 : index
      %60 = vector.load %arg8[%c2, %c15_63, %c0_64] : memref<18x48x4xbf16, #tpu.memory_space<vmem>>, vector<16x16x4xbf16>
      %61 = vector.shape_cast %60 : vector<16x16x4xbf16> to vector<256x4xbf16>
      %c0_65 = arith.constant 0 : index
      %c24 = arith.constant 24 : index
      %62 = vector.load %arg9[%c0_65, %c24] : memref<256x36xbf16, #tpu.memory_space<vmem>>, vector<256x4xbf16>
      tpu.vector_store %arg9[%c0_65, %c24], %61 {strides = array<i32>} : memref<256x36xbf16, #tpu.memory_space<vmem>>, vector<256x4xbf16>,
      %c2_66 = arith.constant 2 : index
      %c16_67 = arith.constant 16 : index
      %c0_68 = arith.constant 0 : index
      %63 = vector.load %arg8[%c2_66, %c16_67, %c0_68] : memref<18x48x4xbf16, #tpu.memory_space<vmem>>, vector<16x16x4xbf16>
      %64 = vector.shape_cast %63 : vector<16x16x4xbf16> to vector<256x4xbf16>
      %c0_69 = arith.constant 0 : index
      %c28 = arith.constant 28 : index
      %65 = vector.load %arg9[%c0_69, %c28] : memref<256x36xbf16, #tpu.memory_space<vmem>>, vector<256x4xbf16>
      tpu.vector_store %arg9[%c0_69, %c28], %64 {strides = array<i32>} : memref<256x36xbf16, #tpu.memory_space<vmem>>, vector<256x4xbf16>,
      %c2_70 = arith.constant 2 : index
      %c17_71 = arith.constant 17 : index
      %c0_72 = arith.constant 0 : index
      %66 = vector.load %arg8[%c2_70, %c17_71, %c0_72] : memref<18x48x4xbf16, #tpu.memory_space<vmem>>, vector<16x16x4xbf16>
      %67 = vector.shape_cast %66 : vector<16x16x4xbf16> to vector<256x4xbf16>
      %c0_73 = arith.constant 0 : index
      %c32_74 = arith.constant 32 : index
      %68 = vector.load %arg9[%c0_73, %c32_74] : memref<256x36xbf16, #tpu.memory_space<vmem>>, vector<256x4xbf16>
      tpu.vector_store %arg9[%c0_73, %c32_74], %67 {strides = array<i32>} : memref<256x36xbf16, #tpu.memory_space<vmem>>, vector<256x4xbf16>,
    } else {
    }
    %c0 = arith.constant 0 : index
    %c0_1 = arith.constant 0 : index
    %3 = vector.load %arg9[%c0, %c0_1] : memref<256x36xbf16, #tpu.memory_space<vmem>>, vector<256x36xbf16>
    %c0_2 = arith.constant 0 : index
    %c0_3 = arith.constant 0 : index
    %4 = vector.load %arg3[%c0_2, %c0_3] : memref<36x128xbf16, #tpu.memory_space<vmem>>, vector<36x128xbf16>
    %cst = arith.constant dense<0.000000e+00> : vector<256x128xf32>
    %5 = tpu.matmul %3, %4, %cst {dimension_numbers = #tpu.dot_dimension_numbers<[1], [0], [0], [1], [0, 0, 1, 1], [], []>} : vector<256x36xbf16>, vector<36x128xbf16>, vector<256x128xf32> -> vector<256x128xf32>
    %c0_4 = arith.constant 0 : index
    %c0_5 = arith.constant 0 : index
    %6 = vector.load %arg4[%c0_4, %c0_5] : memref<1x128xf32, #tpu.memory_space<vmem>>, vector<1x128xf32>
    %7 = vector.broadcast %6 : vector<1x128xf32> to vector<256x128xf32>
    %8 = arith.addf %5, %7 : vector<256x128xf32>
    %cst_6 = arith.constant 0.000000e+00 : f32
    %9 = vector.broadcast %cst_6 : f32 to vector<256x128xf32>
    %10 = arith.subf %9, %8 : vector<256x128xf32>
    %11 = math.exp %10 : vector<256x128xf32>
    %cst_7 = arith.constant 1.000000e+00 : f32
    %12 = vector.broadcast %cst_7 : f32 to vector<256x128xf32>
    %13 = arith.addf %12, %11 : vector<256x128xf32>
    %14 = tpu.reciprocal %13 {approx = true} : vector<256x128xf32> -> vector<256x128xf32>
    %15 = arith.mulf %8, %14 : vector<256x128xf32>
    %16 = arith.truncf %15 : vector<256x128xf32> to vector<256x128xbf16>
    %c0_8 = arith.constant 0 : index
    %c0_9 = arith.constant 0 : index
    %c0_10 = arith.constant 0 : index
    %17 = vector.load %arg5[%c0_8, %c0_9, %c0_10] : memref<1x256x128xbf16, #tpu.memory_space<vmem>>, vector<1x256x128xbf16>
    %18 = vector.shape_cast %17 : vector<1x256x128xbf16> to vector<256x128xbf16>
    %19 = vector.shape_cast %16 : vector<256x128xbf16> to vector<1x256x128xbf16>
    tpu.vector_store %arg5[%c0_8, %c0_9, %c0_10], %19 {strides = array<i32>} : memref<1x256x128xbf16, #tpu.memory_space<vmem>>, vector<1x256x128xbf16>,
    %cst_11 = arith.constant dense<0.000000e+00> : vector<128xf32>
    %20 = vector.multi_reduction <add>, %15, %cst_11 [0] : vector<256x128xf32> to vector<128xf32>
    %21 = vector.shape_cast %20 : vector<128xf32> to vector<1x128xf32>
    %c0_12 = arith.constant 0 : index
    %c0_13 = arith.constant 0 : index
    %c0_14 = arith.constant 0 : index
    %22 = vector.load %arg6[%c0_12, %c0_13, %c0_14] : memref<1x1x128xf32, #tpu.memory_space<vmem>>, vector<1x1x128xf32>
    %23 = vector.shape_cast %22 : vector<1x1x128xf32> to vector<1x128xf32>
    %24 = vector.shape_cast %21 : vector<1x128xf32> to vector<1x1x128xf32>
    tpu.vector_store %arg6[%c0_12, %c0_13, %c0_14], %24 {strides = array<i32>} : memref<1x1x128xf32, #tpu.memory_space<vmem>>, vector<1x1x128xf32>,
    %25 = arith.mulf %15, %15 : vector<256x128xf32>
    %cst_15 = arith.constant dense<0.000000e+00> : vector<128xf32>
    %26 = vector.multi_reduction <add>, %25, %cst_15 [0] : vector<256x128xf32> to vector<128xf32>
    %27 = vector.shape_cast %26 : vector<128xf32> to vector<1x128xf32>
    %c0_16 = arith.constant 0 : index
    %c0_17 = arith.constant 0 : index
    %c0_18 = arith.constant 0 : index
    %28 = vector.load %arg7[%c0_16, %c0_17, %c0_18] : memref<1x1x128xf32, #tpu.memory_space<vmem>>, vector<1x1x128xf32>
    %29 = vector.shape_cast %28 : vector<1x1x128xf32> to vector<1x128xf32>
    %30 = vector.shape_cast %27 : vector<1x128xf32> to vector<1x1x128xf32>
    tpu.vector_store %arg7[%c0_16, %c0_17, %c0_18], %30 {strides = array<i32>} : memref<1x1x128xf32, #tpu.memory_space<vmem>>, vector<1x1x128xf32>,
    return
  }
  func.func @transform_0(%arg0: i32, %arg1: i32) -> (i32, i32, i32, i32) {
    %c0_i32 = arith.constant 0 : i32
    %c0_i32_0 = arith.constant 0 : i32
    %c0_i32_1 = arith.constant 0 : i32
    %c0_i32_2 = arith.constant 0 : i32
    return %arg0, %c0_i32, %c0_i32_0, %c0_i32_1 : i32, i32, i32, i32
  }
  func.func @transform_1(%arg0: i32, %arg1: i32) -> (i32, i32) {
    %c0_i32 = arith.constant 0 : i32
    %c0_i32_0 = arith.constant 0 : i32
    return %c0_i32, %arg1 : i32, i32
  }
  func.func @transform_2(%arg0: i32, %arg1: i32) -> (i32, i32) {
    %c0_i32 = arith.constant 0 : i32
    %c0_i32_0 = arith.constant 0 : i32
    return %c0_i32, %arg1 : i32, i32
  }
  func.func @transform_3(%arg0: i32, %arg1: i32) -> (i32, i32, i32) {
    %c0_i32 = arith.constant 0 : i32
    %c0_i32_0 = arith.constant 0 : i32
    return %arg0, %c0_i32, %arg1 : i32, i32, i32
  }
  func.func @transform_4(%arg0: i32, %arg1: i32) -> (i32, i32, i32) {
    %c0_i32 = arith.constant 0 : i32
    %c0_i32_0 = arith.constant 0 : i32
    return %arg0, %c0_i32, %arg1 : i32, i32, i32
  }
  func.func @transform_5(%arg0: i32, %arg1: i32) -> (i32, i32, i32) {
    %c0_i32 = arith.constant 0 : i32
    %c0_i32_0 = arith.constant 0 : i32
    return %arg0, %c0_i32, %arg1 : i32, i32, i32
  }
}

</mosaic_0001>

<llo_original>
// kernel: tpu_custom_call.1
$region0: #{tpu_custom_call.1}
  #allocation0 [shape = 'u32[]', space=smem, size = 0x4, offset = 0x4, fixed_abs, tag = 'smem constant byte address 0x4 - core index']
  #allocation1 [shape = 'u32[144,128]{1,0:T(1,128)}', space=vmem, size = 0x12000, scoped, tag = 'internal scratch']
  #allocation2 [shape = 'bf16[18,48,4]{2,1,0:T(16,128)(2,1)}', space=vmem, size = 0x36000, scoped, tag = 'scratch operand']
  #allocation3 [shape = 'bf16[256,36]{1,0:T(16,128)(2,1)}', space=vmem, size = 0x10000, scoped, tag = 'scratch operand']
  %s0 = inlined_call_operand.vmem [shape: bf16[2,16,16,4], index: 0, kind: input, shape index: {}]
  %s1 = inlined_call_operand.vmem [shape: bf16[36,128], index: 1, kind: input, shape index: {}]
  %s2 = inlined_call_operand.vmem [shape: f32[1,128], index: 2, kind: input, shape index: {}]
  %s3 = inlined_call_operand.hbm [shape: bf16[2,256,128], index: 3, kind: output, shape index: {0}]
  %s4 = inlined_call_operand.hbm [shape: f32[2,1,128], index: 4, kind: output, shape index: {1}]
  %s5 = inlined_call_operand.hbm [shape: f32[2,1,128], index: 5, kind: output, shape index: {2}]
  %6 = xla_tuple %s3, %s4, %s5
  %s7 = sld [smem:[#allocation0]]
  $region65: #{tpu_custom_call.1} parent=0
    _
  %s9 = ssub.s32 1, %s7
  %s10 = scalar_select 0, %s9, %s7
  $region1: #{tpu_custom_call.1} parent=0
    #allocation4 [shape = 'u8[131072]{0}', space=vmem, size = 0x20000, scoped, tag = 'output window, operand 0']
    #allocation5 [shape = 's32[2]{0}', space=sflag, size = 0x8, scoped, tag = 'scoped memory for tpu_custom_call.1']
    #allocation6 [shape = 'u8[1024]{0}', space=vmem, size = 0x400, scoped, tag = 'output window, operand 1']
    #allocation7 [shape = 's32[2]{0}', space=sflag, size = 0x8, scoped, tag = 'scoped memory for tpu_custom_call.1']
    #allocation8 [shape = 'u8[1024]{0}', space=vmem, size = 0x400, scoped, tag = 'output window, operand 2']
    %11 = vsyncpa [#allocation5], 0
    %s12 = scalar_lea.sflag [#allocation5], 1
    %13 = vsyncpa %s12, 0
    %14 = vsyncpa [#allocation7], 0
    %s15 = scalar_lea.sflag [#allocation7], 1
    %16 = vsyncpa %s15, 0
    loop: start=0, step=1, limit=4
    $region2: #{tpu_custom_call.1} parent=1 // loop_pre_header
      _
    $region3: #{tpu_custom_call.1} parent=1 // loop_header
      %s18 = sphi 0, %s22
      %p19 = scmp.ge.s32.totalorder %s18, 4
      %s25 = sphi 0, %s37
      %s26 = sphi 0, %s33
      %s27 = sphi 0, %s25
      %s28 = sphi 0, %s26
      %s29 = sphi 0, %s27
      %s30 = sphi 0, %s28
      %s40 = sphi 0, %s42
      %s43 = sphi 0, %s40
      %s44 = sphi 0, %s43
      %s60 = sphi 0, %s44
      %s66 = sphi 0, %s68
      %s69 = sphi 0, %s66
      %s70 = sphi 0, %s69
      %s86 = sphi 0, %s70
      %s92 = sphi 0, %s94
      %s95 = sphi 0, %s92
      %s96 = sphi 0, %s95
      %s112 = sphi 0, %s96
      %s120 = sphi 0, %s122
      %s123 = sphi 0, %s120
      %s124 = sphi 0, %s123
      %s140 = sphi 0, %s124
      %s148 = sphi 0, %s150
      %s151 = sphi 0, %s148
      %s152 = sphi 0, %s151
      %s168 = sphi 0, %s152
      %s176 = sphi 0, %s178
      %s179 = sphi 0, %s176
      %s180 = sphi 0, %s179
      %s196 = sphi 0, %s180
    $region4: #{tpu_custom_call.1} parent=1 // loop_header_branch
      %21 = sbr.rel (%p19) target = $region8
    $region5: #{tpu_custom_call.1} parent=1 // loop_body
      %s23 = ssub.s32 %s18, 1
      %s24 = ssub.s32 %s18, 2
      %s31 = sadd.s32 1, %s26
      %p32 = scmp.ge.s32.totalorder %s31, 1
      %s33 = scalar_select %p32, 0, %s31
      %s34 = sadd.s32 1, %s25
      %s35 = scalar_select %p32, %s34, %s25
      %p36 = scmp.ge.s32.totalorder %s35, 2
      %s37 = scalar_select %p36, 0, %s35
      %s38 = ssub.s32 %s25, %s37
      %p39 = scmp.eq.s32.totalorder %s38, 0
      %s41 = sadd.s32 %s40, 1
      %s42 = scalar_select %p39, %s40, %s41
      %p45 = pneg %p39
      %p46 = scmp.eq.s32.totalorder %s18, 1
      %p47 = por %p45, %p46
      %p48 = scmp.ne.s32.totalorder %s40, %s43
      %p49 = scmp.eq.s32.totalorder %s18, 0
      %p50 = por %p48, %p49
      %p51 = scmp.ne.s32.totalorder %s40, %s43
      %p52 = scmp.eq.s32.totalorder %s23, 1
      %p53 = por %p51, %p52
      %p54 = scmp.ne.s32.totalorder %s43, %s44
      %p55 = scmp.eq.s32.totalorder %s23, 0
      %p56 = por %p54, %p55
      %p57 = scmp.ne.s32.totalorder %s43, %s44
      %p58 = scmp.eq.s32.totalorder %s24, 1
      %p59 = por %p57, %p58
      %p61 = scmp.ne.s32.totalorder %s44, %s60
      %p62 = scmp.eq.s32.totalorder %s24, 0
      %p63 = por %p61, %p62
      %s64 = ssub.s32 %s26, %s33
      %p65 = scmp.eq.s32.totalorder %s64, 0
      %s67 = sadd.s32 %s66, 1
      %s68 = scalar_select %p65, %s66, %s67
      %p71 = pneg %p65
      %p72 = scmp.eq.s32.totalorder %s18, 1
      %p73 = por %p71, %p72
      %p74 = scmp.ne.s32.totalorder %s66, %s69
      %p75 = scmp.eq.s32.totalorder %s18, 0
      %p76 = por %p74, %p75
      %p77 = scmp.ne.s32.totalorder %s66, %s69
      %p78 = scmp.eq.s32.totalorder %s23, 1
      %p79 = por %p77, %p78
      %p80 = scmp.ne.s32.totalorder %s69, %s70
      %p81 = scmp.eq.s32.totalorder %s23, 0
      %p82 = por %p80, %p81
      %p83 = scmp.ne.s32.totalorder %s69, %s70
      %p84 = scmp.eq.s32.totalorder %s24, 1
      %p85 = por %p83, %p84
      %p87 = scmp.ne.s32.totalorder %s70, %s86
      %p88 = scmp.eq.s32.totalorder %s24, 0
      %p89 = por %p87, %p88
      %s90 = ssub.s32 %s26, %s33
      %p91 = scmp.eq.s32.totalorder %s90, 0
      %s93 = sadd.s32 %s92, 1
      %s94 = scalar_select %p91, %s92, %s93
      %p97 = pneg %p91
      %p98 = scmp.eq.s32.totalorder %s18, 1
      %p99 = por %p97, %p98
      %p100 = scmp.ne.s32.totalorder %s92, %s95
      %p101 = scmp.eq.s32.totalorder %s18, 0
      %p102 = por %p100, %p101
      %p103 = scmp.ne.s32.totalorder %s92, %s95
      %p104 = scmp.eq.s32.totalorder %s23, 1
      %p105 = por %p103, %p104
      %p106 = scmp.ne.s32.totalorder %s95, %s96
      %p107 = scmp.eq.s32.totalorder %s23, 0
      %p108 = por %p106, %p107
      %p109 = scmp.ne.s32.totalorder %s95, %s96
      %p110 = scmp.eq.s32.totalorder %s24, 1
      %p111 = por %p109, %p110
      %p113 = scmp.ne.s32.totalorder %s96, %s112
      %p114 = scmp.eq.s32.totalorder %s24, 0
      %p115 = por %p113, %p114
      %s116 = ssub.s32 %s25, %s37
      %s117 = ssub.s32 %s26, %s33
      %s118 = sor.u32 %s116, %s117
      %p119 = scmp.eq.s32.totalorder %s118, 0
      %s121 = sadd.s32 %s120, 1
      %s122 = scalar_select %p119, %s120, %s121
      %p125 = pneg %p119
      %p126 = scmp.eq.s32.totalorder %s18, 1
      %p127 = por %p125, %p126
      %p128 = scmp.ne.s32.totalorder %s120, %s123
      %p129 = scmp.eq.s32.totalorder %s18, 0
      %p130 = por %p128, %p129
      %p131 = scmp.ne.s32.totalorder %s120, %s123
      %p132 = scmp.eq.s32.totalorder %s23, 1
      %p133 = por %p131, %p132
      %p134 = scmp.ne.s32.totalorder %s123, %s124
      %p135 = scmp.eq.s32.totalorder %s23, 0
      %p136 = por %p134, %p135
      %p137 = scmp.ne.s32.totalorder %s123, %s124
      %p138 = scmp.eq.s32.totalorder %s24, 1
      %p139 = por %p137, %p138
      %p141 = scmp.ne.s32.totalorder %s124, %s140
      %p142 = scmp.eq.s32.totalorder %s24, 0
      %p143 = por %p141, %p142
      %s144 = ssub.s32 %s25, %s37
      %s145 = ssub.s32 %s26, %s33
      %s146 = sor.u32 %s144, %s145
      %p147 = scmp.eq.s32.totalorder %s146, 0
      %s149 = sadd.s32 %s148, 1
      %s150 = scalar_select %p147, %s148, %s149
      %p153 = pneg %p147
      %p154 = scmp.eq.s32.totalorder %s18, 1
      %p155 = por %p153, %p154
      %p156 = scmp.ne.s32.totalorder %s148, %s151
      %p157 = scmp.eq.s32.totalorder %s18, 0
      %p158 = por %p156, %p157
      %p159 = scmp.ne.s32.totalorder %s148, %s151
      %p160 = scmp.eq.s32.totalorder %s23, 1
      %p161 = por %p159, %p160
      %p162 = scmp.ne.s32.totalorder %s151, %s152
      %p163 = scmp.eq.s32.totalorder %s23, 0
      %p164 = por %p162, %p163
      %p165 = scmp.ne.s32.totalorder %s151, %s152
      %p166 = scmp.eq.s32.totalorder %s24, 1
      %p167 = por %p165, %p166
      %p169 = scmp.ne.s32.totalorder %s152, %s168
      %p170 = scmp.eq.s32.totalorder %s24, 0
      %p171 = por %p169, %p170
      %s172 = ssub.s32 %s25, %s37
      %s173 = ssub.s32 %s26, %s33
      %s174 = sor.u32 %s172, %s173
      %p175 = scmp.eq.s32.totalorder %s174, 0
      %s177 = sadd.s32 %s176, 1
      %s178 = scalar_select %p175, %s176, %s177
      %p181 = pneg %p175
      %p182 = scmp.eq.s32.totalorder %s18, 1
      %p183 = por %p181, %p182
      %p184 = scmp.ne.s32.totalorder %s176, %s179
      %p185 = scmp.eq.s32.totalorder %s18, 0
      %p186 = por %p184, %p185
      %p187 = scmp.ne.s32.totalorder %s176, %s179
      %p188 = scmp.eq.s32.totalorder %s23, 1
      %p189 = por %p187, %p188
      %p190 = scmp.ne.s32.totalorder %s179, %s180
      %p191 = scmp.eq.s32.totalorder %s23, 0
      %p192 = por %p190, %p191
      %p193 = scmp.ne.s32.totalorder %s179, %s180
      %p194 = scmp.eq.s32.totalorder %s24, 1
      %p195 = por %p193, %p194
      %p197 = scmp.ne.s32.totalorder %s180, %s196
      %p198 = scmp.eq.s32.totalorder %s24, 0
      %p199 = por %p197, %p198
      %p200 = scmp.le.s32.totalorder 1, %s18
      %p201 = scmp.lt.s32.totalorder %s18, 3
      %p202 = pnand %p200, %p201
      %p203 = pneg %p202
      // Predicated region
      $region9: #{tpu_custom_call.1} parent=5 // pred_check
        _
      $region10: #{tpu_custom_call.1} parent=5 // pred_check_branch
        %205 = sbr.rel (%p202) target = $region12
      $region11: #{tpu_custom_call.1} parent=5 // pred_region
        %s206 = ssub.s32 %s18, 1
        // Predicated region
        $region13: #{tpu_custom_call.1} parent=11 // pred_check
          %p207 = pneg %p82
        $region14: #{tpu_custom_call.1} parent=11 // pred_check_branch
          %209 = sbr.rel (%p207) target = $region16
        $region15: #{tpu_custom_call.1} parent=11 // pred_region
          %p210 = scmp.lt.s32.totalorder %s28, 0
          %s211 = scalar_select %p210, %s28, 0
          %s212 = smul.addr %s211, 4
          %s213 = scalar_lea.vmem %s1, %s212
        $region16: #{tpu_custom_call.1} parent=11 // pred_fallthru
          _
        // Predicated region
        $region17: #{tpu_custom_call.1} parent=11 // pred_check
          %p214 = pneg %p108
        $region18: #{tpu_custom_call.1} parent=11 // pred_check_branch
          %216 = sbr.rel (%p214) target = $region20
        $region19: #{tpu_custom_call.1} parent=11 // pred_region
          %p217 = scmp.lt.s32.totalorder %s28, 0
          %s218 = scalar_select %p217, %s28, 0
          %s219 = scalar_lea.vmem %s2, %s218
        $region20: #{tpu_custom_call.1} parent=11 // pred_fallthru
          _
      $region12: #{tpu_custom_call.1} parent=5 // pred_fallthru
        _
      %p220 = scmp.lt.s32.totalorder %s18, 2
      // Predicated region
      $region21: #{tpu_custom_call.1} parent=5 // pred_check
        %p221 = pneg %p220
      $region22: #{tpu_custom_call.1} parent=5 // pred_check_branch
        %223 = sbr.rel (%p221) target = $region24
      $region23: #{tpu_custom_call.1} parent=5 // pred_region
        // Predicated region
        $region25: #{tpu_custom_call.1} parent=23 // pred_check
          %p224 = pneg %p50
        $region26: #{tpu_custom_call.1} parent=23 // pred_check_branch
          %226 = sbr.rel (%p224) target = $region28
        $region27: #{tpu_custom_call.1} parent=23 // pred_region
          %p227 = scmp.lt.s32.totalorder %s25, 1
          %s228 = scalar_select %p227, %s25, 1
          %s229 = smul.addr %s228, 32
          %s230 = smul.addr %s229, 4
          %s231 = scalar_lea.vmem %s0, %s230
        $region28: #{tpu_custom_call.1} parent=23 // pred_fallthru
          _
      $region24: #{tpu_custom_call.1} parent=5 // pred_fallthru
        _
      %p232 = scmp.le.s32.totalorder 1, %s18
      %p233 = scmp.lt.s32.totalorder %s18, 3
      %p234 = pnand %p232, %p233
      %p235 = pneg %p234
      // Predicated region
      $region29: #{tpu_custom_call.1} parent=5 // pred_check
        _
      $region30: #{tpu_custom_call.1} parent=5 // pred_check_branch
        %237 = sbr.rel (%p234) target = $region32
      $region31: #{tpu_custom_call.1} parent=5 // pred_region
        %s238 = ssub.s32 %s18, 1
        %p239 = scmp.lt.s32.totalorder %s27, 1
        %s240 = scalar_select %p239, %s27, 1
        %s241 = smul.addr %s240, 32
        %s242 = smul.addr %s241, 4
        %s243 = scalar_lea.vmem %s0, %s242
        %p244 = pneg %p56
        %p245 = pneg %p53
        %p246 = scmp.lt.s32.totalorder %s28, 0
        %s247 = scalar_select %p246, %s28, 0
        %s248 = smul.addr %s247, 4
        %s249 = scalar_lea.vmem %s1, %s248
        %p250 = pneg %p82
        %p251 = pneg %p79
        %p252 = scmp.lt.s32.totalorder %s28, 0
        %s253 = scalar_select %p252, %s28, 0
        %s254 = scalar_lea.vmem %s2, %s253
        %p255 = pneg %p108
        %p256 = pneg %p105
        %p257 = pneg %p136
        %p258 = pneg %p133
        %s259 = sand.u32 %s123, 1
        %s260 = scalar_lea.sflag [#allocation5], %s259
        %s261 = sand.u32 %s123, 1
        %s262 = smul.addr %s261, 128
        %s263 = scalar_lea.vmem [#allocation4], %s262
        %p264 = pneg %p164
        %p265 = pneg %p161
        %s266 = sand.u32 %s23, 1
        %s267 = scalar_lea.sflag [#allocation7], %s266
        %s268 = sand.u32 %s151, 1
        %s269 = scalar_lea.vmem [#allocation6], %s268
        %p270 = pneg %p192
        %p271 = pneg %p189
        %s272 = sand.u32 %s23, 1
        %s273 = scalar_lea.sflag [#allocation7], %s272
        %s274 = sand.u32 %s179, 1
        %s275 = scalar_lea.vmem [#allocation8], %s274
        %p276 = scmp.lt.s32.totalorder %s27, 1
        %s277 = scalar_select %p276, %s27, 1
        %s278 = smul.addr %s277, 32
        %s279 = smul.addr %s278, 4
        %s280 = scalar_lea.vmem %s0, %s279
        %p281 = scmp.lt.s32.totalorder %s28, 0
        %s282 = scalar_select %p281, %s28, 0
        %s283 = smul.addr %s282, 4
        %s284 = scalar_lea.vmem %s1, %s283
        %p285 = scmp.lt.s32.totalorder %s28, 0
        %s286 = scalar_select %p285, %s28, 0
        %s287 = scalar_lea.vmem %s2, %s286
        %p289 = scmp.eq.s32.totalorder %s28, 0
        // Predicated region
        $region33: #{tpu_custom_call.1} parent=31 // pred_check
          %p290 = pneg %p289
        $region34: #{tpu_custom_call.1} parent=31 // pred_check_branch
          %292 = sbr.rel (%p290) target = $region36
        $region35: #{tpu_custom_call.1} parent=31 // pred_region
          %vm293 = vcmask 31744
          %294 = vst.msk [vmem:[#allocation2] sm:$0xff] %vm293, 0
          %295 = vst.msk [vmem:[#allocation2 + $0x8] sm:$0xff] %vm293, 0
          %296 = vst.msk [vmem:[#allocation2 + $0x10] sm:$0xff] %vm293, 0
          %s297 = scalar_lea.vmem [#allocation2], 408
          %298 = vst.msk [vmem:[%s297] sm:$0xff] %vm293, 0
          %299 = vst.msk [vmem:[%s297 + $0x8] sm:$0xff] %vm293, 0
          %300 = vst.msk [vmem:[%s297 + $0x10] sm:$0xff] %vm293, 0
          %301 = vst.msk [vmem:[#allocation2] sm:$0xff] %vm293, 0
          %302 = vst.msk [vmem:[#allocation2 + $0x18] sm:$0xff] %vm293, 0
          %303 = vst.msk [vmem:[#allocation2 + $0x30] sm:$0xff] %vm293, 0
          %304 = vst.msk [vmem:[#allocation2 + $0x48] sm:$0xff] %vm293, 0
          %305 = vst.msk [vmem:[#allocation2 + $0x60] sm:$0xff] %vm293, 0
          %306 = vst.msk [vmem:[#allocation2 + $0x78] sm:$0xff] %vm293, 0
          %307 = vst.msk [vmem:[#allocation2 + $0x90] sm:$0xff] %vm293, 0
          %308 = vst.msk [vmem:[#allocation2 + $0xa8] sm:$0xff] %vm293, 0
          %309 = vst.msk [vmem:[#allocation2 + $0xc0] sm:$0xff] %vm293, 0
          %310 = vst.msk [vmem:[#allocation2 + $0xd8] sm:$0xff] %vm293, 0
          %311 = vst.msk [vmem:[#allocation2 + $0xf0] sm:$0xff] %vm293, 0
          %312 = vst.msk [vmem:[#allocation2 + $0x108] sm:$0xff] %vm293, 0
          %313 = vst.msk [vmem:[#allocation2 + $0x120] sm:$0xff] %vm293, 0
          %314 = vst.msk [vmem:[#allocation2 + $0x138] sm:$0xff] %vm293, 0
          %315 = vst.msk [vmem:[#allocation2 + $0x150] sm:$0xff] %vm293, 0
          %316 = vst.msk [vmem:[#allocation2 + $0x168] sm:$0xff] %vm293, 0
          %317 = vst.msk [vmem:[#allocation2 + $0x180] sm:$0xff] %vm293, 0
          %318 = vst.msk [vmem:[#allocation2 + $0x198] sm:$0xff] %vm293, 0
          %319 = vst.msk [vmem:[#allocation2 + $0x10] sm:$0xff] %vm293, 0
          %320 = vst.msk [vmem:[#allocation2 + $0x28] sm:$0xff] %vm293, 0
          %321 = vst.msk [vmem:[#allocation2 + $0x40] sm:$0xff] %vm293, 0
          %322 = vst.msk [vmem:[#allocation2 + $0x58] sm:$0xff] %vm293, 0
          %323 = vst.msk [vmem:[#allocation2 + $0x70] sm:$0xff] %vm293, 0
          %324 = vst.msk [vmem:[#allocation2 + $0x88] sm:$0xff] %vm293, 0
          %325 = vst.msk [vmem:[#allocation2 + $0xa0] sm:$0xff] %vm293, 0
          %326 = vst.msk [vmem:[#allocation2 + $0xb8] sm:$0xff] %vm293, 0
          %327 = vst.msk [vmem:[#allocation2 + $0xd0] sm:$0xff] %vm293, 0
          %328 = vst.msk [vmem:[#allocation2 + $0xe8] sm:$0xff] %vm293, 0
          %329 = vst.msk [vmem:[#allocation2 + $0x100] sm:$0xff] %vm293, 0
          %330 = vst.msk [vmem:[#allocation2 + $0x118] sm:$0xff] %vm293, 0
          %331 = vst.msk [vmem:[#allocation2 + $0x130] sm:$0xff] %vm293, 0
          %332 = vst.msk [vmem:[#allocation2 + $0x148] sm:$0xff] %vm293, 0
          %333 = vst.msk [vmem:[#allocation2 + $0x160] sm:$0xff] %vm293, 0
          %334 = vst.msk [vmem:[#allocation2 + $0x178] sm:$0xff] %vm293, 0
          %335 = vst.msk [vmem:[#allocation2 + $0x190] sm:$0xff] %vm293, 0
          %336 = vst.msk [vmem:[#allocation2 + $0x1a8] sm:$0xff] %vm293, 0
          %v337 = vld [vmem:[%s280] sm:$0xf]
          %v338 = vld [vmem:[%s280 + $0x4] sm:$0xf]
          %v339 = vld [vmem:[%s280 + $0x8] sm:$0xf]
          %v340 = vld [vmem:[%s280 + $0xc] sm:$0xf]
          %v341 = vld [vmem:[%s280 + $0x10] sm:$0xf]
          %v342 = vld [vmem:[%s280 + $0x14] sm:$0xf]
          %v343 = vld [vmem:[%s280 + $0x18] sm:$0xf]
          %v344 = vld [vmem:[%s280 + $0x1c] sm:$0xf]
          %v345 = vld [vmem:[%s280 + $0x20] sm:$0xf]
          %v346 = vld [vmem:[%s280 + $0x24] sm:$0xf]
          %v347 = vld [vmem:[%s280 + $0x28] sm:$0xf]
          %v348 = vld [vmem:[%s280 + $0x2c] sm:$0xf]
          %v349 = vld [vmem:[%s280 + $0x30] sm:$0xf]
          %v350 = vld [vmem:[%s280 + $0x34] sm:$0xf]
          %v351 = vld [vmem:[%s280 + $0x38] sm:$0xf]
          %v352 = vld [vmem:[%s280 + $0x3c] sm:$0xf]
          %v353 = vld [vmem:[%s280 + $0x40] sm:$0xf]
          %v354 = vld [vmem:[%s280 + $0x44] sm:$0xf]
          %v355 = vld [vmem:[%s280 + $0x48] sm:$0xf]
          %v356 = vld [vmem:[%s280 + $0x4c] sm:$0xf]
          %v357 = vld [vmem:[%s280 + $0x50] sm:$0xf]
          %v358 = vld [vmem:[%s280 + $0x54] sm:$0xf]
          %v359 = vld [vmem:[%s280 + $0x58] sm:$0xf]
          %v360 = vld [vmem:[%s280 + $0x5c] sm:$0xf]
          %v361 = vld [vmem:[%s280 + $0x60] sm:$0xf]
          %v362 = vld [vmem:[%s280 + $0x64] sm:$0xf]
          %v363 = vld [vmem:[%s280 + $0x68] sm:$0xf]
          %v364 = vld [vmem:[%s280 + $0x6c] sm:$0xf]
          %v365 = vld [vmem:[%s280 + $0x70] sm:$0xf]
          %v366 = vld [vmem:[%s280 + $0x74] sm:$0xf]
          %v367 = vld [vmem:[%s280 + $0x78] sm:$0xf]
          %v368 = vld [vmem:[%s280 + $0x7c] sm:$0xf]
          %v401 = vunpack.c.l.b16 %v337
          %v402 = vunpack.c.l.b16 %v338
          %v403 = vunpack.c.l.b16 %v339
          %v404 = vunpack.c.l.b16 %v340
          %v405 = vunpack.c.l.b16 %v341
          %v406 = vunpack.c.l.b16 %v342
          %v407 = vunpack.c.l.b16 %v343
          %v408 = vunpack.c.l.b16 %v344
          %v409 = vunpack.c.l.b16 %v345
          %v410 = vunpack.c.l.b16 %v346
          %v411 = vunpack.c.l.b16 %v347
          %v412 = vunpack.c.l.b16 %v348
          %v413 = vunpack.c.l.b16 %v349
          %v414 = vunpack.c.l.b16 %v350
          %v415 = vunpack.c.l.b16 %v351
          %v416 = vunpack.c.l.b16 %v352
          %v417 = vunpack.c.l.b16 %v353
          %v418 = vunpack.c.l.b16 %v354
          %v419 = vunpack.c.l.b16 %v355
          %v420 = vunpack.c.l.b16 %v356
          %v421 = vunpack.c.l.b16 %v357
          %v422 = vunpack.c.l.b16 %v358
          %v423 = vunpack.c.l.b16 %v359
          %v424 = vunpack.c.l.b16 %v360
          %v425 = vunpack.c.l.b16 %v361
          %v426 = vunpack.c.l.b16 %v362
          %v427 = vunpack.c.l.b16 %v363
          %v428 = vunpack.c.l.b16 %v364
          %v429 = vunpack.c.l.b16 %v365
          %v430 = vunpack.c.l.b16 %v366
          %v431 = vunpack.c.l.b16 %v367
          %v432 = vunpack.c.l.b16 %v368
          %v433 = vpack.c.b16 %v402, %v401
          %v434 = vpack.c.b16 %v404, %v403
          %v435 = vpack.c.b16 %v406, %v405
          %v436 = vpack.c.b16 %v408, %v407
          %v437 = vpack.c.b16 %v410, %v409
          %v438 = vpack.c.b16 %v412, %v411
          %v439 = vpack.c.b16 %v414, %v413
          %v440 = vpack.c.b16 %v416, %v415
          %v441 = vpack.c.b16 %v418, %v417
          %v442 = vpack.c.b16 %v420, %v419
          %v443 = vpack.c.b16 %v422, %v421
          %v444 = vpack.c.b16 %v424, %v423
          %v445 = vpack.c.b16 %v426, %v425
          %v446 = vpack.c.b16 %v428, %v427
          %v447 = vpack.c.b16 %v430, %v429
          %v448 = vpack.c.b16 %v432, %v431
          %s465 = scalar_lea.vmem [#allocation2], 24
          %466 = vst.msk [vmem:[%s465 + $0x8] sm:$0xff] %vm293, %v433
          %467 = vst.msk [vmem:[%s465 + $0x20] sm:$0xff] %vm293, %v434
          %468 = vst.msk [vmem:[%s465 + $0x38] sm:$0xff] %vm293, %v435
          %469 = vst.msk [vmem:[%s465 + $0x50] sm:$0xff] %vm293, %v436
          %470 = vst.msk [vmem:[%s465 + $0x68] sm:$0xff] %vm293, %v437
          %471 = vst.msk [vmem:[%s465 + $0x80] sm:$0xff] %vm293, %v438
          %472 = vst.msk [vmem:[%s465 + $0x98] sm:$0xff] %vm293, %v439
          %473 = vst.msk [vmem:[%s465 + $0xb0] sm:$0xff] %vm293, %v440
          %474 = vst.msk [vmem:[%s465 + $0xc8] sm:$0xff] %vm293, %v441
          %475 = vst.msk [vmem:[%s465 + $0xe0] sm:$0xff] %vm293, %v442
          %476 = vst.msk [vmem:[%s465 + $0xf8] sm:$0xff] %vm293, %v443
          %477 = vst.msk [vmem:[%s465 + $0x110] sm:$0xff] %vm293, %v444
          %478 = vst.msk [vmem:[%s465 + $0x128] sm:$0xff] %vm293, %v445
          %479 = vst.msk [vmem:[%s465 + $0x140] sm:$0xff] %vm293, %v446
          %480 = vst.msk [vmem:[%s465 + $0x158] sm:$0xff] %vm293, %v447
          %481 = vst.msk [vmem:[%s465 + $0x170] sm:$0xff] %vm293, %v448
          %v482 = vld [vmem:[#allocation2] sm:$0x80]
          %v483 = vld [vmem:[#allocation2 + $0x8] sm:$0xff]
          %v484 = vld [vmem:[#allocation2 + $0x18] sm:$0x80]
          %v485 = vld [vmem:[#allocation2 + $0x20] sm:$0xff]
          %v486 = vld [vmem:[#allocation2 + $0x30] sm:$0x80]
          %v487 = vld [vmem:[#allocation2 + $0x38] sm:$0xff]
          %v488 = vld [vmem:[#allocation2 + $0x48] sm:$0x80]
          %v489 = vld [vmem:[#allocation2 + $0x50] sm:$0xff]
          %v490 = vld [vmem:[#allocation2 + $0x60] sm:$0x80]
          %v491 = vld [vmem:[#allocation2 + $0x68] sm:$0xff]
          %v492 = vld [vmem:[#allocation2 + $0x78] sm:$0x80]
          %v493 = vld [vmem:[#allocation2 + $0x80] sm:$0xff]
          %v494 = vld [vmem:[#allocation2 + $0x90] sm:$0x80]
          %v495 = vld [vmem:[#allocation2 + $0x98] sm:$0xff]
          %v496 = vld [vmem:[#allocation2 + $0xa8] sm:$0x80]
          %v497 = vld [vmem:[#allocation2 + $0xb0] sm:$0xff]
          %v498 = vld [vmem:[#allocation2 + $0xc0] sm:$0x80]
          %v499 = vld [vmem:[#allocation2 + $0xc8] sm:$0xff]
          %v500 = vld [vmem:[#allocation2 + $0xd8] sm:$0x80]
          %v501 = vld [vmem:[#allocation2 + $0xe0] sm:$0xff]
          %v502 = vld [vmem:[#allocation2 + $0xf0] sm:$0x80]
          %v503 = vld [vmem:[#allocation2 + $0xf8] sm:$0xff]
          %v504 = vld [vmem:[#allocation2 + $0x108] sm:$0x80]
          %v505 = vld [vmem:[#allocation2 + $0x110] sm:$0xff]
          %v506 = vld [vmem:[#allocation2 + $0x120] sm:$0x80]
          %v507 = vld [vmem:[#allocation2 + $0x128] sm:$0xff]
          %v508 = vld [vmem:[#allocation2 + $0x138] sm:$0x80]
          %v509 = vld [vmem:[#allocation2 + $0x140] sm:$0xff]
          %v510 = vld [vmem:[#allocation2 + $0x150] sm:$0x80]
          %v511 = vld [vmem:[#allocation2 + $0x158] sm:$0xff]
          %v512 = vld [vmem:[#allocation2 + $0x168] sm:$0x80]
          %v513 = vld [vmem:[#allocation2 + $0x170] sm:$0xff]
          %vm514 = vsmask.f32 256
          %v516 = vshrl.u32 %v482, 16
          %v518 = vrot.slane %v516, 7
          %v520 = vshrl.u32 %v483, 16
          %v522 = vrot.slane %v520, 7
          %v523 = vshll.u32 %v483, 16
          %v525 = vor.u32 %v522, %v523
          %v526 = vsel %vm514, %v518, %v525
          %v528 = vshrl.u32 %v484, 16
          %v530 = vrot.slane %v528, 7
          %v532 = vshrl.u32 %v485, 16
          %v534 = vrot.slane %v532, 7
          %v535 = vshll.u32 %v485, 16
          %v537 = vor.u32 %v534, %v535
          %v538 = vsel %vm514, %v530, %v537
          %v540 = vshrl.u32 %v486, 16
          %v542 = vrot.slane %v540, 7
          %v544 = vshrl.u32 %v487, 16
          %v546 = vrot.slane %v544, 7
          %v547 = vshll.u32 %v487, 16
          %v549 = vor.u32 %v546, %v547
          %v550 = vsel %vm514, %v542, %v549
          %v552 = vshrl.u32 %v488, 16
          %v554 = vrot.slane %v552, 7
          %v556 = vshrl.u32 %v489, 16
          %v558 = vrot.slane %v556, 7
          %v559 = vshll.u32 %v489, 16
          %v561 = vor.u32 %v558, %v559
          %v562 = vsel %vm514, %v554, %v561
          %v564 = vshrl.u32 %v490, 16
          %v566 = vrot.slane %v564, 7
          %v568 = vshrl.u32 %v491, 16
          %v570 = vrot.slane %v568, 7
          %v571 = vshll.u32 %v491, 16
          %v573 = vor.u32 %v570, %v571
          %v574 = vsel %vm514, %v566, %v573
          %v576 = vshrl.u32 %v492, 16
          %v578 = vrot.slane %v576, 7
          %v580 = vshrl.u32 %v493, 16
          %v582 = vrot.slane %v580, 7
          %v583 = vshll.u32 %v493, 16
          %v585 = vor.u32 %v582, %v583
          %v586 = vsel %vm514, %v578, %v585
          %v588 = vshrl.u32 %v494, 16
          %v590 = vrot.slane %v588, 7
          %v592 = vshrl.u32 %v495, 16
          %v594 = vrot.slane %v592, 7
          %v595 = vshll.u32 %v495, 16
          %v597 = vor.u32 %v594, %v595
          %v598 = vsel %vm514, %v590, %v597
          %v600 = vshrl.u32 %v496, 16
          %v602 = vrot.slane %v600, 7
          %v604 = vshrl.u32 %v497, 16
          %v606 = vrot.slane %v604, 7
          %v607 = vshll.u32 %v497, 16
          %v609 = vor.u32 %v606, %v607
          %v610 = vsel %vm514, %v602, %v609
          %v612 = vshrl.u32 %v498, 16
          %v614 = vrot.slane %v612, 7
          %v616 = vshrl.u32 %v499, 16
          %v618 = vrot.slane %v616, 7
          %v619 = vshll.u32 %v499, 16
          %v621 = vor.u32 %v618, %v619
          %v622 = vsel %vm514, %v614, %v621
          %v624 = vshrl.u32 %v500, 16
          %v626 = vrot.slane %v624, 7
          %v628 = vshrl.u32 %v501, 16
          %v630 = vrot.slane %v628, 7
          %v631 = vshll.u32 %v501, 16
          %v633 = vor.u32 %v630, %v631
          %v634 = vsel %vm514, %v626, %v633
          %v636 = vshrl.u32 %v502, 16
          %v638 = vrot.slane %v636, 7
          %v640 = vshrl.u32 %v503, 16
          %v642 = vrot.slane %v640, 7
          %v643 = vshll.u32 %v503, 16
          %v645 = vor.u32 %v642, %v643
          %v646 = vsel %vm514, %v638, %v645
          %v648 = vshrl.u32 %v504, 16
          %v650 = vrot.slane %v648, 7
          %v652 = vshrl.u32 %v505, 16
          %v654 = vrot.slane %v652, 7
          %v655 = vshll.u32 %v505, 16
          %v657 = vor.u32 %v654, %v655
          %v658 = vsel %vm514, %v650, %v657
          %v660 = vshrl.u32 %v506, 16
          %v662 = vrot.slane %v660, 7
          %v664 = vshrl.u32 %v507, 16
          %v666 = vrot.slane %v664, 7
          %v667 = vshll.u32 %v507, 16
          %v669 = vor.u32 %v666, %v667
          %v670 = vsel %vm514, %v662, %v669
          %v672 = vshrl.u32 %v508, 16
          %v674 = vrot.slane %v672, 7
          %v676 = vshrl.u32 %v509, 16
          %v678 = vrot.slane %v676, 7
          %v679 = vshll.u32 %v509, 16
          %v681 = vor.u32 %v678, %v679
          %v682 = vsel %vm514, %v674, %v681
          %v684 = vshrl.u32 %v510, 16
          %v686 = vrot.slane %v684, 7
          %v688 = vshrl.u32 %v511, 16
          %v690 = vrot.slane %v688, 7
          %v691 = vshll.u32 %v511, 16
          %v693 = vor.u32 %v690, %v691
          %v694 = vsel %vm514, %v686, %v693
          %v696 = vshrl.u32 %v512, 16
          %v698 = vrot.slane %v696, 7
          %v700 = vshrl.u32 %v513, 16
          %v702 = vrot.slane %v700, 7
          %v703 = vshll.u32 %v513, 16
          %v705 = vor.u32 %v702, %v703
          %v706 = vsel %vm514, %v698, %v705
          %723 = vst.msk [vmem:[#allocation3] sm:$0xff] %vm293, %v526
          %724 = vst.msk [vmem:[#allocation3 + $0x8] sm:$0xff] %vm293, %v538
          %725 = vst.msk [vmem:[#allocation3 + $0x10] sm:$0xff] %vm293, %v550
          %726 = vst.msk [vmem:[#allocation3 + $0x18] sm:$0xff] %vm293, %v562
          %727 = vst.msk [vmem:[#allocation3 + $0x20] sm:$0xff] %vm293, %v574
          %728 = vst.msk [vmem:[#allocation3 + $0x28] sm:$0xff] %vm293, %v586
          %729 = vst.msk [vmem:[#allocation3 + $0x30] sm:$0xff] %vm293, %v598
          %730 = vst.msk [vmem:[#allocation3 + $0x38] sm:$0xff] %vm293, %v610
          %731 = vst.msk [vmem:[#allocation3 + $0x40] sm:$0xff] %vm293, %v622
          %732 = vst.msk [vmem:[#allocation3 + $0x48] sm:$0xff] %vm293, %v634
          %733 = vst.msk [vmem:[#allocation3 + $0x50] sm:$0xff] %vm293, %v646
          %734 = vst.msk [vmem:[#allocation3 + $0x58] sm:$0xff] %vm293, %v658
          %735 = vst.msk [vmem:[#allocation3 + $0x60] sm:$0xff] %vm293, %v670
          %736 = vst.msk [vmem:[#allocation3 + $0x68] sm:$0xff] %vm293, %v682
          %737 = vst.msk [vmem:[#allocation3 + $0x70] sm:$0xff] %vm293, %v694
          %738 = vst.msk [vmem:[#allocation3 + $0x78] sm:$0xff] %vm293, %v706
          %v739 = vld [vmem:[#allocation2 + $0x8] sm:$0xff]
          %v740 = vld [vmem:[#allocation2 + $0x20] sm:$0xff]
          %v741 = vld [vmem:[#allocation2 + $0x38] sm:$0xff]
          %v742 = vld [vmem:[#allocation2 + $0x50] sm:$0xff]
          %v743 = vld [vmem:[#allocation2 + $0x68] sm:$0xff]
          %v744 = vld [vmem:[#allocation2 + $0x80] sm:$0xff]
          %v745 = vld [vmem:[#allocation2 + $0x98] sm:$0xff]
          %v746 = vld [vmem:[#allocation2 + $0xb0] sm:$0xff]
          %v747 = vld [vmem:[#allocation2 + $0xc8] sm:$0xff]
          %v748 = vld [vmem:[#allocation2 + $0xe0] sm:$0xff]
          %v749 = vld [vmem:[#allocation2 + $0xf8] sm:$0xff]
          %v750 = vld [vmem:[#allocation2 + $0x110] sm:$0xff]
          %v751 = vld [vmem:[#allocation2 + $0x128] sm:$0xff]
          %v752 = vld [vmem:[#allocation2 + $0x140] sm:$0xff]
          %v753 = vld [vmem:[#allocation2 + $0x158] sm:$0xff]
          %v754 = vld [vmem:[#allocation2 + $0x170] sm:$0xff]
          %771 = vrot.lane.b32.xlu0 %v739, 4
          %v772 = vpop.permute.xlu0 %771
          %773 = vrot.lane.b32.xlu0 %v740, 4
          %v774 = vpop.permute.xlu0 %773
          %775 = vrot.lane.b32.xlu0 %v741, 4
          %v776 = vpop.permute.xlu0 %775
          %777 = vrot.lane.b32.xlu0 %v742, 4
          %v778 = vpop.permute.xlu0 %777
          %779 = vrot.lane.b32.xlu0 %v743, 4
          %v780 = vpop.permute.xlu0 %779
          %781 = vrot.lane.b32.xlu0 %v744, 4
          %v782 = vpop.permute.xlu0 %781
          %783 = vrot.lane.b32.xlu0 %v745, 4
          %v784 = vpop.permute.xlu0 %783
          %785 = vrot.lane.b32.xlu0 %v746, 4
          %v786 = vpop.permute.xlu0 %785
          %787 = vrot.lane.b32.xlu0 %v747, 4
          %v788 = vpop.permute.xlu0 %787
          %789 = vrot.lane.b32.xlu0 %v748, 4
          %v790 = vpop.permute.xlu0 %789
          %791 = vrot.lane.b32.xlu0 %v749, 4
          %v792 = vpop.permute.xlu0 %791
          %793 = vrot.lane.b32.xlu0 %v750, 4
          %v794 = vpop.permute.xlu0 %793
          %795 = vrot.lane.b32.xlu0 %v751, 4
          %v796 = vpop.permute.xlu0 %795
          %797 = vrot.lane.b32.xlu0 %v752, 4
          %v798 = vpop.permute.xlu0 %797
          %799 = vrot.lane.b32.xlu0 %v753, 4
          %v800 = vpop.permute.xlu0 %799
          %801 = vrot.lane.b32.xlu0 %v754, 4
          %v802 = vpop.permute.xlu0 %801
          %vm819 = vcmask 64544
          %820 = vst.msk [vmem:[#allocation3] sm:$0xff] %vm819, %v772
          %821 = vst.msk [vmem:[#allocation3 + $0x8] sm:$0xff] %vm819, %v774
          %822 = vst.msk [vmem:[#allocation3 + $0x10] sm:$0xff] %vm819, %v776
          %823 = vst.msk [vmem:[#allocation3 + $0x18] sm:$0xff] %vm819, %v778
          %824 = vst.msk [vmem:[#allocation3 + $0x20] sm:$0xff] %vm819, %v780
          %825 = vst.msk [vmem:[#allocation3 + $0x28] sm:$0xff] %vm819, %v782
          %826 = vst.msk [vmem:[#allocation3 + $0x30] sm:$0xff] %vm819, %v784
          %827 = vst.msk [vmem:[#allocation3 + $0x38] sm:$0xff] %vm819, %v786
          %828 = vst.msk [vmem:[#allocation3 + $0x40] sm:$0xff] %vm819, %v788
          %829 = vst.msk [vmem:[#allocation3 + $0x48] sm:$0xff] %vm819, %v790
          %830 = vst.msk [vmem:[#allocation3 + $0x50] sm:$0xff] %vm819, %v792
          %831 = vst.msk [vmem:[#allocation3 + $0x58] sm:$0xff] %vm819, %v794
          %832 = vst.msk [vmem:[#allocation3 + $0x60] sm:$0xff] %vm819, %v796
          %833 = vst.msk [vmem:[#allocation3 + $0x68] sm:$0xff] %vm819, %v798
          %834 = vst.msk [vmem:[#allocation3 + $0x70] sm:$0xff] %vm819, %v800
          %835 = vst.msk [vmem:[#allocation3 + $0x78] sm:$0xff] %vm819, %v802
          %v836 = vld [vmem:[#allocation2 + $0x8] sm:$0xff]
          %v837 = vld [vmem:[#allocation2 + $0x10] sm:$0x1]
          %v838 = vld [vmem:[#allocation2 + $0x20] sm:$0xff]
          %v839 = vld [vmem:[#allocation2 + $0x28] sm:$0x1]
          %v840 = vld [vmem:[#allocation2 + $0x38] sm:$0xff]
          %v841 = vld [vmem:[#allocation2 + $0x40] sm:$0x1]
          %v842 = vld [vmem:[#allocation2 + $0x50] sm:$0xff]
          %v843 = vld [vmem:[#allocation2 + $0x58] sm:$0x1]
          %v844 = vld [vmem:[#allocation2 + $0x68] sm:$0xff]
          %v845 = vld [vmem:[#allocation2 + $0x70] sm:$0x1]
          %v846 = vld [vmem:[#allocation2 + $0x80] sm:$0xff]
          %v847 = vld [vmem:[#allocation2 + $0x88] sm:$0x1]
          %v848 = vld [vmem:[#allocation2 + $0x98] sm:$0xff]
          %v849 = vld [vmem:[#allocation2 + $0xa0] sm:$0x1]
          %v850 = vld [vmem:[#allocation2 + $0xb0] sm:$0xff]
          %v851 = vld [vmem:[#allocation2 + $0xb8] sm:$0x1]
          %v852 = vld [vmem:[#allocation2 + $0xc8] sm:$0xff]
          %v853 = vld [vmem:[#allocation2 + $0xd0] sm:$0x1]
          %v854 = vld [vmem:[#allocation2 + $0xe0] sm:$0xff]
          %v855 = vld [vmem:[#allocation2 + $0xe8] sm:$0x1]
          %v856 = vld [vmem:[#allocation2 + $0xf8] sm:$0xff]
          %v857 = vld [vmem:[#allocation2 + $0x100] sm:$0x1]
          %v858 = vld [vmem:[#allocation2 + $0x110] sm:$0xff]
          %v859 = vld [vmem:[#allocation2 + $0x118] sm:$0x1]
          %v860 = vld [vmem:[#allocation2 + $0x128] sm:$0xff]
          %v861 = vld [vmem:[#allocation2 + $0x130] sm:$0x1]
          %v862 = vld [vmem:[#allocation2 + $0x140] sm:$0xff]
          %v863 = vld [vmem:[#allocation2 + $0x148] sm:$0x1]
          %v864 = vld [vmem:[#allocation2 + $0x158] sm:$0xff]
          %v865 = vld [vmem:[#allocation2 + $0x160] sm:$0x1]
          %v866 = vld [vmem:[#allocation2 + $0x170] sm:$0xff]
          %v867 = vld [vmem:[#allocation2 + $0x178] sm:$0x1]
          %vm868 = vsmask.f32 7424
          %v870 = vshrl.u32 %v836, 16
          %v872 = vshll.u32 %v836, 16
          %v874 = vrot.slane %v872, 1
          %v875 = vor.u32 %v870, %v874
          %v877 = vshll.u32 %v837, 16
          %v879 = vrot.slane %v877, 1
          %v880 = vsel %vm868, %v875, %v879
          %v882 = vshrl.u32 %v838, 16
          %v884 = vshll.u32 %v838, 16
          %v886 = vrot.slane %v884, 1
          %v887 = vor.u32 %v882, %v886
          %v889 = vshll.u32 %v839, 16
          %v891 = vrot.slane %v889, 1
          %v892 = vsel %vm868, %v887, %v891
          %v894 = vshrl.u32 %v840, 16
          %v896 = vshll.u32 %v840, 16
          %v898 = vrot.slane %v896, 1
          %v899 = vor.u32 %v894, %v898
          %v901 = vshll.u32 %v841, 16
          %v903 = vrot.slane %v901, 1
          %v904 = vsel %vm868, %v899, %v903
          %v906 = vshrl.u32 %v842, 16
          %v908 = vshll.u32 %v842, 16
          %v910 = vrot.slane %v908, 1
          %v911 = vor.u32 %v906, %v910
          %v913 = vshll.u32 %v843, 16
          %v915 = vrot.slane %v913, 1
          %v916 = vsel %vm868, %v911, %v915
          %v918 = vshrl.u32 %v844, 16
          %v920 = vshll.u32 %v844, 16
          %v922 = vrot.slane %v920, 1
          %v923 = vor.u32 %v918, %v922
          %v925 = vshll.u32 %v845, 16
          %v927 = vrot.slane %v925, 1
          %v928 = vsel %vm868, %v923, %v927
          %v930 = vshrl.u32 %v846, 16
          %v932 = vshll.u32 %v846, 16
          %v934 = vrot.slane %v932, 1
          %v935 = vor.u32 %v930, %v934
          %v937 = vshll.u32 %v847, 16
          %v939 = vrot.slane %v937, 1
          %v940 = vsel %vm868, %v935, %v939
          %v942 = vshrl.u32 %v848, 16
          %v944 = vshll.u32 %v848, 16
          %v946 = vrot.slane %v944, 1
          %v947 = vor.u32 %v942, %v946
          %v949 = vshll.u32 %v849, 16
          %v951 = vrot.slane %v949, 1
          %v952 = vsel %vm868, %v947, %v951
          %v954 = vshrl.u32 %v850, 16
          %v956 = vshll.u32 %v850, 16
          %v958 = vrot.slane %v956, 1
          %v959 = vor.u32 %v954, %v958
          %v961 = vshll.u32 %v851, 16
          %v963 = vrot.slane %v961, 1
          %v964 = vsel %vm868, %v959, %v963
          %v966 = vshrl.u32 %v852, 16
          %v968 = vshll.u32 %v852, 16
          %v970 = vrot.slane %v968, 1
          %v971 = vor.u32 %v966, %v970
          %v973 = vshll.u32 %v853, 16
          %v975 = vrot.slane %v973, 1
          %v976 = vsel %vm868, %v971, %v975
          %v978 = vshrl.u32 %v854, 16
          %v980 = vshll.u32 %v854, 16
          %v982 = vrot.slane %v980, 1
          %v983 = vor.u32 %v978, %v982
          %v985 = vshll.u32 %v855, 16
          %v987 = vrot.slane %v985, 1
          %v988 = vsel %vm868, %v983, %v987
          %v990 = vshrl.u32 %v856, 16
          %v992 = vshll.u32 %v856, 16
          %v994 = vrot.slane %v992, 1
          %v995 = vor.u32 %v990, %v994
          %v997 = vshll.u32 %v857, 16
          %v999 = vrot.slane %v997, 1
          %v1000 = vsel %vm868, %v995, %v999
          %v1002 = vshrl.u32 %v858, 16
          %v1004 = vshll.u32 %v858, 16
          %v1006 = vrot.slane %v1004, 1
          %v1007 = vor.u32 %v1002, %v1006
          %v1009 = vshll.u32 %v859, 16
          %v1011 = vrot.slane %v1009, 1
          %v1012 = vsel %vm868, %v1007, %v1011
          %v1014 = vshrl.u32 %v860, 16
          %v1016 = vshll.u32 %v860, 16
          %v1018 = vrot.slane %v1016, 1
          %v1019 = vor.u32 %v1014, %v1018
          %v1021 = vshll.u32 %v861, 16
          %v1023 = vrot.slane %v1021, 1
          %v1024 = vsel %vm868, %v1019, %v1023
          %v1026 = vshrl.u32 %v862, 16
          %v1028 = vshll.u32 %v862, 16
          %v1030 = vrot.slane %v1028, 1
          %v1031 = vor.u32 %v1026, %v1030
          %v1033 = vshll.u32 %v863, 16
          %v1035 = vrot.slane %v1033, 1
          %v1036 = vsel %vm868, %v1031, %v1035
          %v1038 = vshrl.u32 %v864, 16
          %v1040 = vshll.u32 %v864, 16
          %v1042 = vrot.slane %v1040, 1
          %v1043 = vor.u32 %v1038, %v1042
          %v1045 = vshll.u32 %v865, 16
          %v1047 = vrot.slane %v1045, 1
          %v1048 = vsel %vm868, %v1043, %v1047
          %v1050 = vshrl.u32 %v866, 16
          %v1052 = vshll.u32 %v866, 16
          %v1054 = vrot.slane %v1052, 1
          %v1055 = vor.u32 %v1050, %v1054
          %v1057 = vshll.u32 %v867, 16
          %v1059 = vrot.slane %v1057, 1
          %v1060 = vsel %vm868, %v1055, %v1059
          %1061 = vrot.lane.b32.xlu0 %v880, 8
          %v1062 = vpop.permute.xlu0 %1061
          %1063 = vrot.lane.b32.xlu0 %v892, 8
          %v1064 = vpop.permute.xlu0 %1063
          %1065 = vrot.lane.b32.xlu0 %v904, 8
          %v1066 = vpop.permute.xlu0 %1065
          %1067 = vrot.lane.b32.xlu0 %v916, 8
          %v1068 = vpop.permute.xlu0 %1067
          %1069 = vrot.lane.b32.xlu0 %v928, 8
          %v1070 = vpop.permute.xlu0 %1069
          %1071 = vrot.lane.b32.xlu0 %v940, 8
          %v1072 = vpop.permute.xlu0 %1071
          %1073 = vrot.lane.b32.xlu0 %v952, 8
          %v1074 = vpop.permute.xlu0 %1073
          %1075 = vrot.lane.b32.xlu0 %v964, 8
          %v1076 = vpop.permute.xlu0 %1075
          %1077 = vrot.lane.b32.xlu0 %v976, 8
          %v1078 = vpop.permute.xlu0 %1077
          %1079 = vrot.lane.b32.xlu0 %v988, 8
          %v1080 = vpop.permute.xlu0 %1079
          %1081 = vrot.lane.b32.xlu0 %v1000, 8
          %v1082 = vpop.permute.xlu0 %1081
          %1083 = vrot.lane.b32.xlu0 %v1012, 8
          %v1084 = vpop.permute.xlu0 %1083
          %1085 = vrot.lane.b32.xlu0 %v1024, 8
          %v1086 = vpop.permute.xlu0 %1085
          %1087 = vrot.lane.b32.xlu0 %v1036, 8
          %v1088 = vpop.permute.xlu0 %1087
          %1089 = vrot.lane.b32.xlu0 %v1048, 8
          %v1090 = vpop.permute.xlu0 %1089
          %1091 = vrot.lane.b32.xlu0 %v1060, 8
          %v1092 = vpop.permute.xlu0 %1091
          %vm1109 = vcmask 97344
          %1110 = vst.msk [vmem:[#allocation3] sm:$0xff] %vm1109, %v1062
          %1111 = vst.msk [vmem:[#allocation3 + $0x8] sm:$0xff] %vm1109, %v1064
          %1112 = vst.msk [vmem:[#allocation3 + $0x10] sm:$0xff] %vm1109, %v1066
          %1113 = vst.msk [vmem:[#allocation3 + $0x18] sm:$0xff] %vm1109, %v1068
          %1114 = vst.msk [vmem:[#allocation3 + $0x20] sm:$0xff] %vm1109, %v1070
          %1115 = vst.msk [vmem:[#allocation3 + $0x28] sm:$0xff] %vm1109, %v1072
          %1116 = vst.msk [vmem:[#allocation3 + $0x30] sm:$0xff] %vm1109, %v1074
          %1117 = vst.msk [vmem:[#allocation3 + $0x38] sm:$0xff] %vm1109, %v1076
          %1118 = vst.msk [vmem:[#allocation3 + $0x40] sm:$0xff] %vm1109, %v1078
          %1119 = vst.msk [vmem:[#allocation3 + $0x48] sm:$0xff] %vm1109, %v1080
          %1120 = vst.msk [vmem:[#allocation3 + $0x50] sm:$0xff] %vm1109, %v1082
          %1121 = vst.msk [vmem:[#allocation3 + $0x58] sm:$0xff] %vm1109, %v1084
          %1122 = vst.msk [vmem:[#allocation3 + $0x60] sm:$0xff] %vm1109, %v1086
          %1123 = vst.msk [vmem:[#allocation3 + $0x68] sm:$0xff] %vm1109, %v1088
          %1124 = vst.msk [vmem:[#allocation3 + $0x70] sm:$0xff] %vm1109, %v1090
          %1125 = vst.msk [vmem:[#allocation3 + $0x78] sm:$0xff] %vm1109, %v1092
          %v1126 = vld [vmem:[%s465] sm:$0x80]
          %v1127 = vld [vmem:[%s465 + $0x8] sm:$0xff]
          %v1128 = vld [vmem:[%s465 + $0x18] sm:$0x80]
          %v1129 = vld [vmem:[%s465 + $0x20] sm:$0xff]
          %v1130 = vld [vmem:[%s465 + $0x30] sm:$0x80]
          %v1131 = vld [vmem:[%s465 + $0x38] sm:$0xff]
          %v1132 = vld [vmem:[%s465 + $0x48] sm:$0x80]
          %v1133 = vld [vmem:[%s465 + $0x50] sm:$0xff]
          %v1134 = vld [vmem:[%s465 + $0x60] sm:$0x80]
          %v1135 = vld [vmem:[%s465 + $0x68] sm:$0xff]
          %v1136 = vld [vmem:[%s465 + $0x78] sm:$0x80]
          %v1137 = vld [vmem:[%s465 + $0x80] sm:$0xff]
          %v1138 = vld [vmem:[%s465 + $0x90] sm:$0x80]
          %v1139 = vld [vmem:[%s465 + $0x98] sm:$0xff]
          %v1140 = vld [vmem:[%s465 + $0xa8] sm:$0x80]
          %v1141 = vld [vmem:[%s465 + $0xb0] sm:$0xff]
          %v1142 = vld [vmem:[%s465 + $0xc0] sm:$0x80]
          %v1143 = vld [vmem:[%s465 + $0xc8] sm:$0xff]
          %v1144 = vld [vmem:[%s465 + $0xd8] sm:$0x80]
          %v1145 = vld [vmem:[%s465 + $0xe0] sm:$0xff]
          %v1146 = vld [vmem:[%s465 + $0xf0] sm:$0x80]
          %v1147 = vld [vmem:[%s465 + $0xf8] sm:$0xff]
          %v1148 = vld [vmem:[%s465 + $0x108] sm:$0x80]
          %v1149 = vld [vmem:[%s465 + $0x110] sm:$0xff]
          %v1150 = vld [vmem:[%s465 + $0x120] sm:$0x80]
          %v1151 = vld [vmem:[%s465 + $0x128] sm:$0xff]
          %v1152 = vld [vmem:[%s465 + $0x138] sm:$0x80]
          %v1153 = vld [vmem:[%s465 + $0x140] sm:$0xff]
          %v1154 = vld [vmem:[%s465 + $0x150] sm:$0x80]
          %v1155 = vld [vmem:[%s465 + $0x158] sm:$0xff]
          %v1156 = vld [vmem:[%s465 + $0x168] sm:$0x80]
          %v1157 = vld [vmem:[%s465 + $0x170] sm:$0xff]
          %v1159 = vshrl.u32 %v1126, 16
          %v1161 = vrot.slane %v1159, 7
          %v1163 = vshrl.u32 %v1127, 16
          %v1165 = vrot.slane %v1163, 7
          %v1166 = vshll.u32 %v1127, 16
          %v1168 = vor.u32 %v1165, %v1166
          %v1169 = vsel %vm514, %v1161, %v1168
          %v1171 = vshrl.u32 %v1128, 16
          %v1173 = vrot.slane %v1171, 7
          %v1175 = vshrl.u32 %v1129, 16
          %v1177 = vrot.slane %v1175, 7
          %v1178 = vshll.u32 %v1129, 16
          %v1180 = vor.u32 %v1177, %v1178
          %v1181 = vsel %vm514, %v1173, %v1180
          %v1183 = vshrl.u32 %v1130, 16
          %v1185 = vrot.slane %v1183, 7
          %v1187 = vshrl.u32 %v1131, 16
          %v1189 = vrot.slane %v1187, 7
          %v1190 = vshll.u32 %v1131, 16
          %v1192 = vor.u32 %v1189, %v1190
          %v1193 = vsel %vm514, %v1185, %v1192
          %v1195 = vshrl.u32 %v1132, 16
          %v1197 = vrot.slane %v1195, 7
          %v1199 = vshrl.u32 %v1133, 16
          %v1201 = vrot.slane %v1199, 7
          %v1202 = vshll.u32 %v1133, 16
          %v1204 = vor.u32 %v1201, %v1202
          %v1205 = vsel %vm514, %v1197, %v1204
          %v1207 = vshrl.u32 %v1134, 16
          %v1209 = vrot.slane %v1207, 7
          %v1211 = vshrl.u32 %v1135, 16
          %v1213 = vrot.slane %v1211, 7
          %v1214 = vshll.u32 %v1135, 16
          %v1216 = vor.u32 %v1213, %v1214
          %v1217 = vsel %vm514, %v1209, %v1216
          %v1219 = vshrl.u32 %v1136, 16
          %v1221 = vrot.slane %v1219, 7
          %v1223 = vshrl.u32 %v1137, 16
          %v1225 = vrot.slane %v1223, 7
          %v1226 = vshll.u32 %v1137, 16
          %v1228 = vor.u32 %v1225, %v1226
          %v1229 = vsel %vm514, %v1221, %v1228
          %v1231 = vshrl.u32 %v1138, 16
          %v1233 = vrot.slane %v1231, 7
          %v1235 = vshrl.u32 %v1139, 16
          %v1237 = vrot.slane %v1235, 7
          %v1238 = vshll.u32 %v1139, 16
          %v1240 = vor.u32 %v1237, %v1238
          %v1241 = vsel %vm514, %v1233, %v1240
          %v1243 = vshrl.u32 %v1140, 16
          %v1245 = vrot.slane %v1243, 7
          %v1247 = vshrl.u32 %v1141, 16
          %v1249 = vrot.slane %v1247, 7
          %v1250 = vshll.u32 %v1141, 16
          %v1252 = vor.u32 %v1249, %v1250
          %v1253 = vsel %vm514, %v1245, %v1252
          %v1255 = vshrl.u32 %v1142, 16
          %v1257 = vrot.slane %v1255, 7
          %v1259 = vshrl.u32 %v1143, 16
          %v1261 = vrot.slane %v1259, 7
          %v1262 = vshll.u32 %v1143, 16
          %v1264 = vor.u32 %v1261, %v1262
          %v1265 = vsel %vm514, %v1257, %v1264
          %v1267 = vshrl.u32 %v1144, 16
          %v1269 = vrot.slane %v1267, 7
          %v1271 = vshrl.u32 %v1145, 16
          %v1273 = vrot.slane %v1271, 7
          %v1274 = vshll.u32 %v1145, 16
          %v1276 = vor.u32 %v1273, %v1274
          %v1277 = vsel %vm514, %v1269, %v1276
          %v1279 = vshrl.u32 %v1146, 16
          %v1281 = vrot.slane %v1279, 7
          %v1283 = vshrl.u32 %v1147, 16
          %v1285 = vrot.slane %v1283, 7
          %v1286 = vshll.u32 %v1147, 16
          %v1288 = vor.u32 %v1285, %v1286
          %v1289 = vsel %vm514, %v1281, %v1288
          %v1291 = vshrl.u32 %v1148, 16
          %v1293 = vrot.slane %v1291, 7
          %v1295 = vshrl.u32 %v1149, 16
          %v1297 = vrot.slane %v1295, 7
          %v1298 = vshll.u32 %v1149, 16
          %v1300 = vor.u32 %v1297, %v1298
          %v1301 = vsel %vm514, %v1293, %v1300
          %v1303 = vshrl.u32 %v1150, 16
          %v1305 = vrot.slane %v1303, 7
          %v1307 = vshrl.u32 %v1151, 16
          %v1309 = vrot.slane %v1307, 7
          %v1310 = vshll.u32 %v1151, 16
          %v1312 = vor.u32 %v1309, %v1310
          %v1313 = vsel %vm514, %v1305, %v1312
          %v1315 = vshrl.u32 %v1152, 16
          %v1317 = vrot.slane %v1315, 7
          %v1319 = vshrl.u32 %v1153, 16
          %v1321 = vrot.slane %v1319, 7
          %v1322 = vshll.u32 %v1153, 16
          %v1324 = vor.u32 %v1321, %v1322
          %v1325 = vsel %vm514, %v1317, %v1324
          %v1327 = vshrl.u32 %v1154, 16
          %v1329 = vrot.slane %v1327, 7
          %v1331 = vshrl.u32 %v1155, 16
          %v1333 = vrot.slane %v1331, 7
          %v1334 = vshll.u32 %v1155, 16
          %v1336 = vor.u32 %v1333, %v1334
          %v1337 = vsel %vm514, %v1329, %v1336
          %v1339 = vshrl.u32 %v1156, 16
          %v1341 = vrot.slane %v1339, 7
          %v1343 = vshrl.u32 %v1157, 16
          %v1345 = vrot.slane %v1343, 7
          %v1346 = vshll.u32 %v1157, 16
          %v1348 = vor.u32 %v1345, %v1346
          %v1349 = vsel %vm514, %v1341, %v1348
          %1350 = vrot.lane.b32.xlu0 %v1169, 12
          %v1351 = vpop.permute.xlu0 %1350
          %1352 = vrot.lane.b32.xlu0 %v1181, 12
          %v1353 = vpop.permute.xlu0 %1352
          %1354 = vrot.lane.b32.xlu0 %v1193, 12
          %v1355 = vpop.permute.xlu0 %1354
          %1356 = vrot.lane.b32.xlu0 %v1205, 12
          %v1357 = vpop.permute.xlu0 %1356
          %1358 = vrot.lane.b32.xlu0 %v1217, 12
          %v1359 = vpop.permute.xlu0 %1358
          %1360 = vrot.lane.b32.xlu0 %v1229, 12
          %v1361 = vpop.permute.xlu0 %1360
          %1362 = vrot.lane.b32.xlu0 %v1241, 12
          %v1363 = vpop.permute.xlu0 %1362
          %1364 = vrot.lane.b32.xlu0 %v1253, 12
          %v1365 = vpop.permute.xlu0 %1364
          %1366 = vrot.lane.b32.xlu0 %v1265, 12
          %v1367 = vpop.permute.xlu0 %1366
          %1368 = vrot.lane.b32.xlu0 %v1277, 12
          %v1369 = vpop.permute.xlu0 %1368
          %1370 = vrot.lane.b32.xlu0 %v1289, 12
          %v1371 = vpop.permute.xlu0 %1370
          %1372 = vrot.lane.b32.xlu0 %v1301, 12
          %v1373 = vpop.permute.xlu0 %1372
          %1374 = vrot.lane.b32.xlu0 %v1313, 12
          %v1375 = vpop.permute.xlu0 %1374
          %1376 = vrot.lane.b32.xlu0 %v1325, 12
          %v1377 = vpop.permute.xlu0 %1376
          %1378 = vrot.lane.b32.xlu0 %v1337, 12
          %v1379 = vpop.permute.xlu0 %1378
          %1380 = vrot.lane.b32.xlu0 %v1349, 12
          %v1381 = vpop.permute.xlu0 %1380
          %vm1398 = vcmask 130144
          %1399 = vst.msk [vmem:[#allocation3] sm:$0xff] %vm1398, %v1351
          %1400 = vst.msk [vmem:[#allocation3 + $0x8] sm:$0xff] %vm1398, %v1353
          %1401 = vst.msk [vmem:[#allocation3 + $0x10] sm:$0xff] %vm1398, %v1355
          %1402 = vst.msk [vmem:[#allocation3 + $0x18] sm:$0xff] %vm1398, %v1357
          %1403 = vst.msk [vmem:[#allocation3 + $0x20] sm:$0xff] %vm1398, %v1359
          %1404 = vst.msk [vmem:[#allocation3 + $0x28] sm:$0xff] %vm1398, %v1361
          %1405 = vst.msk [vmem:[#allocation3 + $0x30] sm:$0xff] %vm1398, %v1363
          %1406 = vst.msk [vmem:[#allocation3 + $0x38] sm:$0xff] %vm1398, %v1365
          %1407 = vst.msk [vmem:[#allocation3 + $0x40] sm:$0xff] %vm1398, %v1367
          %1408 = vst.msk [vmem:[#allocation3 + $0x48] sm:$0xff] %vm1398, %v1369
          %1409 = vst.msk [vmem:[#allocation3 + $0x50] sm:$0xff] %vm1398, %v1371
          %1410 = vst.msk [vmem:[#allocation3 + $0x58] sm:$0xff] %vm1398, %v1373
          %1411 = vst.msk [vmem:[#allocation3 + $0x60] sm:$0xff] %vm1398, %v1375
          %1412 = vst.msk [vmem:[#allocation3 + $0x68] sm:$0xff] %vm1398, %v1377
          %1413 = vst.msk [vmem:[#allocation3 + $0x70] sm:$0xff] %vm1398, %v1379
          %1414 = vst.msk [vmem:[#allocation3 + $0x78] sm:$0xff] %vm1398, %v1381
          %v1415 = vld [vmem:[%s465 + $0x8] sm:$0xff]
          %v1416 = vld [vmem:[%s465 + $0x20] sm:$0xff]
          %v1417 = vld [vmem:[%s465 + $0x38] sm:$0xff]
          %v1418 = vld [vmem:[%s465 + $0x50] sm:$0xff]
          %v1419 = vld [vmem:[%s465 + $0x68] sm:$0xff]
          %v1420 = vld [vmem:[%s465 + $0x80] sm:$0xff]
          %v1421 = vld [vmem:[%s465 + $0x98] sm:$0xff]
          %v1422 = vld [vmem:[%s465 + $0xb0] sm:$0xff]
          %v1423 = vld [vmem:[%s465 + $0xc8] sm:$0xff]
          %v1424 = vld [vmem:[%s465 + $0xe0] sm:$0xff]
          %v1425 = vld [vmem:[%s465 + $0xf8] sm:$0xff]
          %v1426 = vld [vmem:[%s465 + $0x110] sm:$0xff]
          %v1427 = vld [vmem:[%s465 + $0x128] sm:$0xff]
          %v1428 = vld [vmem:[%s465 + $0x140] sm:$0xff]
          %v1429 = vld [vmem:[%s465 + $0x158] sm:$0xff]
          %v1430 = vld [vmem:[%s465 + $0x170] sm:$0xff]
          %1447 = vrot.lane.b32.xlu0 %v1415, 16
          %v1448 = vpop.permute.xlu0 %1447
          %1449 = vrot.lane.b32.xlu0 %v1416, 16
          %v1450 = vpop.permute.xlu0 %1449
          %1451 = vrot.lane.b32.xlu0 %v1417, 16
          %v1452 = vpop.permute.xlu0 %1451
          %1453 = vrot.lane.b32.xlu0 %v1418, 16
          %v1454 = vpop.permute.xlu0 %1453
          %1455 = vrot.lane.b32.xlu0 %v1419, 16
          %v1456 = vpop.permute.xlu0 %1455
          %1457 = vrot.lane.b32.xlu0 %v1420, 16
          %v1458 = vpop.permute.xlu0 %1457
          %1459 = vrot.lane.b32.xlu0 %v1421, 16
          %v1460 = vpop.permute.xlu0 %1459
          %1461 = vrot.lane.b32.xlu0 %v1422, 16
          %v1462 = vpop.permute.xlu0 %1461
          %1463 = vrot.lane.b32.xlu0 %v1423, 16
          %v1464 = vpop.permute.xlu0 %1463
          %1465 = vrot.lane.b32.xlu0 %v1424, 16
          %v1466 = vpop.permute.xlu0 %1465
          %1467 = vrot.lane.b32.xlu0 %v1425, 16
          %v1468 = vpop.permute.xlu0 %1467
          %1469 = vrot.lane.b32.xlu0 %v1426, 16
          %v1470 = vpop.permute.xlu0 %1469
          %1471 = vrot.lane.b32.xlu0 %v1427, 16
          %v1472 = vpop.permute.xlu0 %1471
          %1473 = vrot.lane.b32.xlu0 %v1428, 16
          %v1474 = vpop.permute.xlu0 %1473
          %1475 = vrot.lane.b32.xlu0 %v1429, 16
          %v1476 = vpop.permute.xlu0 %1475
          %1477 = vrot.lane.b32.xlu0 %v1430, 16
          %v1478 = vpop.permute.xlu0 %1477
          %vm1495 = vcmask 162944
          %1496 = vst.msk [vmem:[#allocation3] sm:$0xff] %vm1495, %v1448
          %1497 = vst.msk [vmem:[#allocation3 + $0x8] sm:$0xff] %vm1495, %v1450
          %1498 = vst.msk [vmem:[#allocation3 + $0x10] sm:$0xff] %vm1495, %v1452
          %1499 = vst.msk [vmem:[#allocation3 + $0x18] sm:$0xff] %vm1495, %v1454
          %1500 = vst.msk [vmem:[#allocation3 + $0x20] sm:$0xff] %vm1495, %v1456
          %1501 = vst.msk [vmem:[#allocation3 + $0x28] sm:$0xff] %vm1495, %v1458
          %1502 = vst.msk [vmem:[#allocation3 + $0x30] sm:$0xff] %vm1495, %v1460
          %1503 = vst.msk [vmem:[#allocation3 + $0x38] sm:$0xff] %vm1495, %v1462
          %1504 = vst.msk [vmem:[#allocation3 + $0x40] sm:$0xff] %vm1495, %v1464
          %1505 = vst.msk [vmem:[#allocation3 + $0x48] sm:$0xff] %vm1495, %v1466
          %1506 = vst.msk [vmem:[#allocation3 + $0x50] sm:$0xff] %vm1495, %v1468
          %1507 = vst.msk [vmem:[#allocation3 + $0x58] sm:$0xff] %vm1495, %v1470
          %1508 = vst.msk [vmem:[#allocation3 + $0x60] sm:$0xff] %vm1495, %v1472
          %1509 = vst.msk [vmem:[#allocation3 + $0x68] sm:$0xff] %vm1495, %v1474
          %1510 = vst.msk [vmem:[#allocation3 + $0x70] sm:$0xff] %vm1495, %v1476
          %1511 = vst.msk [vmem:[#allocation3 + $0x78] sm:$0xff] %vm1495, %v1478
          %v1512 = vld [vmem:[%s465 + $0x8] sm:$0xff]
          %v1513 = vld [vmem:[%s465 + $0x10] sm:$0x1]
          %v1514 = vld [vmem:[%s465 + $0x20] sm:$0xff]
          %v1515 = vld [vmem:[%s465 + $0x28] sm:$0x1]
          %v1516 = vld [vmem:[%s465 + $0x38] sm:$0xff]
          %v1517 = vld [vmem:[%s465 + $0x40] sm:$0x1]
          %v1518 = vld [vmem:[%s465 + $0x50] sm:$0xff]
          %v1519 = vld [vmem:[%s465 + $0x58] sm:$0x1]
          %v1520 = vld [vmem:[%s465 + $0x68] sm:$0xff]
          %v1521 = vld [vmem:[%s465 + $0x70] sm:$0x1]
          %v1522 = vld [vmem:[%s465 + $0x80] sm:$0xff]
          %v1523 = vld [vmem:[%s465 + $0x88] sm:$0x1]
          %v1524 = vld [vmem:[%s465 + $0x98] sm:$0xff]
          %v1525 = vld [vmem:[%s465 + $0xa0] sm:$0x1]
          %v1526 = vld [vmem:[%s465 + $0xb0] sm:$0xff]
          %v1527 = vld [vmem:[%s465 + $0xb8] sm:$0x1]
          %v1528 = vld [vmem:[%s465 + $0xc8] sm:$0xff]
          %v1529 = vld [vmem:[%s465 + $0xd0] sm:$0x1]
          %v1530 = vld [vmem:[%s465 + $0xe0] sm:$0xff]
          %v1531 = vld [vmem:[%s465 + $0xe8] sm:$0x1]
          %v1532 = vld [vmem:[%s465 + $0xf8] sm:$0xff]
          %v1533 = vld [vmem:[%s465 + $0x100] sm:$0x1]
          %v1534 = vld [vmem:[%s465 + $0x110] sm:$0xff]
          %v1535 = vld [vmem:[%s465 + $0x118] sm:$0x1]
          %v1536 = vld [vmem:[%s465 + $0x128] sm:$0xff]
          %v1537 = vld [vmem:[%s465 + $0x130] sm:$0x1]
          %v1538 = vld [vmem:[%s465 + $0x140] sm:$0xff]
          %v1539 = vld [vmem:[%s465 + $0x148] sm:$0x1]
          %v1540 = vld [vmem:[%s465 + $0x158] sm:$0xff]
          %v1541 = vld [vmem:[%s465 + $0x160] sm:$0x1]
          %v1542 = vld [vmem:[%s465 + $0x170] sm:$0xff]
          %v1543 = vld [vmem:[%s465 + $0x178] sm:$0x1]
          %v1545 = vshrl.u32 %v1512, 16
          %v1547 = vshll.u32 %v1512, 16
          %v1549 = vrot.slane %v1547, 1
          %v1550 = vor.u32 %v1545, %v1549
          %v1552 = vshll.u32 %v1513, 16
          %v1554 = vrot.slane %v1552, 1
          %v1555 = vsel %vm868, %v1550, %v1554
          %v1557 = vshrl.u32 %v1514, 16
          %v1559 = vshll.u32 %v1514, 16
          %v1561 = vrot.slane %v1559, 1
          %v1562 = vor.u32 %v1557, %v1561
          %v1564 = vshll.u32 %v1515, 16
          %v1566 = vrot.slane %v1564, 1
          %v1567 = vsel %vm868, %v1562, %v1566
          %v1569 = vshrl.u32 %v1516, 16
          %v1571 = vshll.u32 %v1516, 16
          %v1573 = vrot.slane %v1571, 1
          %v1574 = vor.u32 %v1569, %v1573
          %v1576 = vshll.u32 %v1517, 16
          %v1578 = vrot.slane %v1576, 1
          %v1579 = vsel %vm868, %v1574, %v1578
          %v1581 = vshrl.u32 %v1518, 16
          %v1583 = vshll.u32 %v1518, 16
          %v1585 = vrot.slane %v1583, 1
          %v1586 = vor.u32 %v1581, %v1585
          %v1588 = vshll.u32 %v1519, 16
          %v1590 = vrot.slane %v1588, 1
          %v1591 = vsel %vm868, %v1586, %v1590
          %v1593 = vshrl.u32 %v1520, 16
          %v1595 = vshll.u32 %v1520, 16
          %v1597 = vrot.slane %v1595, 1
          %v1598 = vor.u32 %v1593, %v1597
          %v1600 = vshll.u32 %v1521, 16
          %v1602 = vrot.slane %v1600, 1
          %v1603 = vsel %vm868, %v1598, %v1602
          %v1605 = vshrl.u32 %v1522, 16
          %v1607 = vshll.u32 %v1522, 16
          %v1609 = vrot.slane %v1607, 1
          %v1610 = vor.u32 %v1605, %v1609
          %v1612 = vshll.u32 %v1523, 16
          %v1614 = vrot.slane %v1612, 1
          %v1615 = vsel %vm868, %v1610, %v1614
          %v1617 = vshrl.u32 %v1524, 16
          %v1619 = vshll.u32 %v1524, 16
          %v1621 = vrot.slane %v1619, 1
          %v1622 = vor.u32 %v1617, %v1621
          %v1624 = vshll.u32 %v1525, 16
          %v1626 = vrot.slane %v1624, 1
          %v1627 = vsel %vm868, %v1622, %v1626
          %v1629 = vshrl.u32 %v1526, 16
          %v1631 = vshll.u32 %v1526, 16
          %v1633 = vrot.slane %v1631, 1
          %v1634 = vor.u32 %v1629, %v1633
          %v1636 = vshll.u32 %v1527, 16
          %v1638 = vrot.slane %v1636, 1
          %v1639 = vsel %vm868, %v1634, %v1638
          %v1641 = vshrl.u32 %v1528, 16
          %v1643 = vshll.u32 %v1528, 16
          %v1645 = vrot.slane %v1643, 1
          %v1646 = vor.u32 %v1641, %v1645
          %v1648 = vshll.u32 %v1529, 16
          %v1650 = vrot.slane %v1648, 1
          %v1651 = vsel %vm868, %v1646, %v1650
          %v1653 = vshrl.u32 %v1530, 16
          %v1655 = vshll.u32 %v1530, 16
          %v1657 = vrot.slane %v1655, 1
          %v1658 = vor.u32 %v1653, %v1657
          %v1660 = vshll.u32 %v1531, 16
          %v1662 = vrot.slane %v1660, 1
          %v1663 = vsel %vm868, %v1658, %v1662
          %v1665 = vshrl.u32 %v1532, 16
          %v1667 = vshll.u32 %v1532, 16
          %v1669 = vrot.slane %v1667, 1
          %v1670 = vor.u32 %v1665, %v1669
          %v1672 = vshll.u32 %v1533, 16
          %v1674 = vrot.slane %v1672, 1
          %v1675 = vsel %vm868, %v1670, %v1674
          %v1677 = vshrl.u32 %v1534, 16
          %v1679 = vshll.u32 %v1534, 16
          %v1681 = vrot.slane %v1679, 1
          %v1682 = vor.u32 %v1677, %v1681
          %v1684 = vshll.u32 %v1535, 16
          %v1686 = vrot.slane %v1684, 1
          %v1687 = vsel %vm868, %v1682, %v1686
          %v1689 = vshrl.u32 %v1536, 16
          %v1691 = vshll.u32 %v1536, 16
          %v1693 = vrot.slane %v1691, 1
          %v1694 = vor.u32 %v1689, %v1693
          %v1696 = vshll.u32 %v1537, 16
          %v1698 = vrot.slane %v1696, 1
          %v1699 = vsel %vm868, %v1694, %v1698
          %v1701 = vshrl.u32 %v1538, 16
          %v1703 = vshll.u32 %v1538, 16
          %v1705 = vrot.slane %v1703, 1
          %v1706 = vor.u32 %v1701, %v1705
          %v1708 = vshll.u32 %v1539, 16
          %v1710 = vrot.slane %v1708, 1
          %v1711 = vsel %vm868, %v1706, %v1710
          %v1713 = vshrl.u32 %v1540, 16
          %v1715 = vshll.u32 %v1540, 16
          %v1717 = vrot.slane %v1715, 1
          %v1718 = vor.u32 %v1713, %v1717
          %v1720 = vshll.u32 %v1541, 16
          %v1722 = vrot.slane %v1720, 1
          %v1723 = vsel %vm868, %v1718, %v1722
          %v1725 = vshrl.u32 %v1542, 16
          %v1727 = vshll.u32 %v1542, 16
          %v1729 = vrot.slane %v1727, 1
          %v1730 = vor.u32 %v1725, %v1729
          %v1732 = vshll.u32 %v1543, 16
          %v1734 = vrot.slane %v1732, 1
          %v1735 = vsel %vm868, %v1730, %v1734
          %1736 = vrot.lane.b32.xlu0 %v1555, 20
          %v1737 = vpop.permute.xlu0 %1736
          %1738 = vrot.lane.b32.xlu0 %v1567, 20
          %v1739 = vpop.permute.xlu0 %1738
          %1740 = vrot.lane.b32.xlu0 %v1579, 20
          %v1741 = vpop.permute.xlu0 %1740
          %1742 = vrot.lane.b32.xlu0 %v1591, 20
          %v1743 = vpop.permute.xlu0 %1742
          %1744 = vrot.lane.b32.xlu0 %v1603, 20
          %v1745 = vpop.permute.xlu0 %1744
          %1746 = vrot.lane.b32.xlu0 %v1615, 20
          %v1747 = vpop.permute.xlu0 %1746
          %1748 = vrot.lane.b32.xlu0 %v1627, 20
          %v1749 = vpop.permute.xlu0 %1748
          %1750 = vrot.lane.b32.xlu0 %v1639, 20
          %v1751 = vpop.permute.xlu0 %1750
          %1752 = vrot.lane.b32.xlu0 %v1651, 20
          %v1753 = vpop.permute.xlu0 %1752
          %1754 = vrot.lane.b32.xlu0 %v1663, 20
          %v1755 = vpop.permute.xlu0 %1754
          %1756 = vrot.lane.b32.xlu0 %v1675, 20
          %v1757 = vpop.permute.xlu0 %1756
          %1758 = vrot.lane.b32.xlu0 %v1687, 20
          %v1759 = vpop.permute.xlu0 %1758
          %1760 = vrot.lane.b32.xlu0 %v1699, 20
          %v1761 = vpop.permute.xlu0 %1760
          %1762 = vrot.lane.b32.xlu0 %v1711, 20
          %v1763 = vpop.permute.xlu0 %1762
          %1764 = vrot.lane.b32.xlu0 %v1723, 20
          %v1765 = vpop.permute.xlu0 %1764
          %1766 = vrot.lane.b32.xlu0 %v1735, 20
          %v1767 = vpop.permute.xlu0 %1766
          %vm1784 = vcmask 195744
          %1785 = vst.msk [vmem:[#allocation3] sm:$0xff] %vm1784, %v1737
          %1786 = vst.msk [vmem:[#allocation3 + $0x8] sm:$0xff] %vm1784, %v1739
          %1787 = vst.msk [vmem:[#allocation3 + $0x10] sm:$0xff] %vm1784, %v1741
          %1788 = vst.msk [vmem:[#allocation3 + $0x18] sm:$0xff] %vm1784, %v1743
          %1789 = vst.msk [vmem:[#allocation3 + $0x20] sm:$0xff] %vm1784, %v1745
          %1790 = vst.msk [vmem:[#allocation3 + $0x28] sm:$0xff] %vm1784, %v1747
          %1791 = vst.msk [vmem:[#allocation3 + $0x30] sm:$0xff] %vm1784, %v1749
          %1792 = vst.msk [vmem:[#allocation3 + $0x38] sm:$0xff] %vm1784, %v1751
          %1793 = vst.msk [vmem:[#allocation3 + $0x40] sm:$0xff] %vm1784, %v1753
          %1794 = vst.msk [vmem:[#allocation3 + $0x48] sm:$0xff] %vm1784, %v1755
          %1795 = vst.msk [vmem:[#allocation3 + $0x50] sm:$0xff] %vm1784, %v1757
          %1796 = vst.msk [vmem:[#allocation3 + $0x58] sm:$0xff] %vm1784, %v1759
          %1797 = vst.msk [vmem:[#allocation3 + $0x60] sm:$0xff] %vm1784, %v1761
          %1798 = vst.msk [vmem:[#allocation3 + $0x68] sm:$0xff] %vm1784, %v1763
          %1799 = vst.msk [vmem:[#allocation3 + $0x70] sm:$0xff] %vm1784, %v1765
          %1800 = vst.msk [vmem:[#allocation3 + $0x78] sm:$0xff] %vm1784, %v1767
          %s1801 = scalar_lea.vmem [#allocation2], 48
          %v1802 = vld [vmem:[%s1801] sm:$0x80]
          %v1803 = vld [vmem:[%s1801 + $0x8] sm:$0xff]
          %v1804 = vld [vmem:[%s1801 + $0x18] sm:$0x80]
          %v1805 = vld [vmem:[%s1801 + $0x20] sm:$0xff]
          %v1806 = vld [vmem:[%s1801 + $0x30] sm:$0x80]
          %v1807 = vld [vmem:[%s1801 + $0x38] sm:$0xff]
          %v1808 = vld [vmem:[%s1801 + $0x48] sm:$0x80]
          %v1809 = vld [vmem:[%s1801 + $0x50] sm:$0xff]
          %v1810 = vld [vmem:[%s1801 + $0x60] sm:$0x80]
          %v1811 = vld [vmem:[%s1801 + $0x68] sm:$0xff]
          %v1812 = vld [vmem:[%s1801 + $0x78] sm:$0x80]
          %v1813 = vld [vmem:[%s1801 + $0x80] sm:$0xff]
          %v1814 = vld [vmem:[%s1801 + $0x90] sm:$0x80]
          %v1815 = vld [vmem:[%s1801 + $0x98] sm:$0xff]
          %v1816 = vld [vmem:[%s1801 + $0xa8] sm:$0x80]
          %v1817 = vld [vmem:[%s1801 + $0xb0] sm:$0xff]
          %v1818 = vld [vmem:[%s1801 + $0xc0] sm:$0x80]
          %v1819 = vld [vmem:[%s1801 + $0xc8] sm:$0xff]
          %v1820 = vld [vmem:[%s1801 + $0xd8] sm:$0x80]
          %v1821 = vld [vmem:[%s1801 + $0xe0] sm:$0xff]
          %v1822 = vld [vmem:[%s1801 + $0xf0] sm:$0x80]
          %v1823 = vld [vmem:[%s1801 + $0xf8] sm:$0xff]
          %v1824 = vld [vmem:[%s1801 + $0x108] sm:$0x80]
          %v1825 = vld [vmem:[%s1801 + $0x110] sm:$0xff]
          %v1826 = vld [vmem:[%s1801 + $0x120] sm:$0x80]
          %v1827 = vld [vmem:[%s1801 + $0x128] sm:$0xff]
          %v1828 = vld [vmem:[%s1801 + $0x138] sm:$0x80]
          %v1829 = vld [vmem:[%s1801 + $0x140] sm:$0xff]
          %v1830 = vld [vmem:[%s1801 + $0x150] sm:$0x80]
          %v1831 = vld [vmem:[%s1801 + $0x158] sm:$0xff]
          %v1832 = vld [vmem:[%s1801 + $0x168] sm:$0x80]
          %v1833 = vld [vmem:[%s1801 + $0x170] sm:$0xff]
          %v1835 = vshrl.u32 %v1802, 16
          %v1837 = vrot.slane %v1835, 7
          %v1839 = vshrl.u32 %v1803, 16
          %v1841 = vrot.slane %v1839, 7
          %v1842 = vshll.u32 %v1803, 16
          %v1844 = vor.u32 %v1841, %v1842
          %v1845 = vsel %vm514, %v1837, %v1844
          %v1847 = vshrl.u32 %v1804, 16
          %v1849 = vrot.slane %v1847, 7
          %v1851 = vshrl.u32 %v1805, 16
          %v1853 = vrot.slane %v1851, 7
          %v1854 = vshll.u32 %v1805, 16
          %v1856 = vor.u32 %v1853, %v1854
          %v1857 = vsel %vm514, %v1849, %v1856
          %v1859 = vshrl.u32 %v1806, 16
          %v1861 = vrot.slane %v1859, 7
          %v1863 = vshrl.u32 %v1807, 16
          %v1865 = vrot.slane %v1863, 7
          %v1866 = vshll.u32 %v1807, 16
          %v1868 = vor.u32 %v1865, %v1866
          %v1869 = vsel %vm514, %v1861, %v1868
          %v1871 = vshrl.u32 %v1808, 16
          %v1873 = vrot.slane %v1871, 7
          %v1875 = vshrl.u32 %v1809, 16
          %v1877 = vrot.slane %v1875, 7
          %v1878 = vshll.u32 %v1809, 16
          %v1880 = vor.u32 %v1877, %v1878
          %v1881 = vsel %vm514, %v1873, %v1880
          %v1883 = vshrl.u32 %v1810, 16
          %v1885 = vrot.slane %v1883, 7
          %v1887 = vshrl.u32 %v1811, 16
          %v1889 = vrot.slane %v1887, 7
          %v1890 = vshll.u32 %v1811, 16
          %v1892 = vor.u32 %v1889, %v1890
          %v1893 = vsel %vm514, %v1885, %v1892
          %v1895 = vshrl.u32 %v1812, 16
          %v1897 = vrot.slane %v1895, 7
          %v1899 = vshrl.u32 %v1813, 16
          %v1901 = vrot.slane %v1899, 7
          %v1902 = vshll.u32 %v1813, 16
          %v1904 = vor.u32 %v1901, %v1902
          %v1905 = vsel %vm514, %v1897, %v1904
          %v1907 = vshrl.u32 %v1814, 16
          %v1909 = vrot.slane %v1907, 7
          %v1911 = vshrl.u32 %v1815, 16
          %v1913 = vrot.slane %v1911, 7
          %v1914 = vshll.u32 %v1815, 16
          %v1916 = vor.u32 %v1913, %v1914
          %v1917 = vsel %vm514, %v1909, %v1916
          %v1919 = vshrl.u32 %v1816, 16
          %v1921 = vrot.slane %v1919, 7
          %v1923 = vshrl.u32 %v1817, 16
          %v1925 = vrot.slane %v1923, 7
          %v1926 = vshll.u32 %v1817, 16
          %v1928 = vor.u32 %v1925, %v1926
          %v1929 = vsel %vm514, %v1921, %v1928
          %v1931 = vshrl.u32 %v1818, 16
          %v1933 = vrot.slane %v1931, 7
          %v1935 = vshrl.u32 %v1819, 16
          %v1937 = vrot.slane %v1935, 7
          %v1938 = vshll.u32 %v1819, 16
          %v1940 = vor.u32 %v1937, %v1938
          %v1941 = vsel %vm514, %v1933, %v1940
          %v1943 = vshrl.u32 %v1820, 16
          %v1945 = vrot.slane %v1943, 7
          %v1947 = vshrl.u32 %v1821, 16
          %v1949 = vrot.slane %v1947, 7
          %v1950 = vshll.u32 %v1821, 16
          %v1952 = vor.u32 %v1949, %v1950
          %v1953 = vsel %vm514, %v1945, %v1952
          %v1955 = vshrl.u32 %v1822, 16
          %v1957 = vrot.slane %v1955, 7
          %v1959 = vshrl.u32 %v1823, 16
          %v1961 = vrot.slane %v1959, 7
          %v1962 = vshll.u32 %v1823, 16
          %v1964 = vor.u32 %v1961, %v1962
          %v1965 = vsel %vm514, %v1957, %v1964
          %v1967 = vshrl.u32 %v1824, 16
          %v1969 = vrot.slane %v1967, 7
          %v1971 = vshrl.u32 %v1825, 16
          %v1973 = vrot.slane %v1971, 7
          %v1974 = vshll.u32 %v1825, 16
          %v1976 = vor.u32 %v1973, %v1974
          %v1977 = vsel %vm514, %v1969, %v1976
          %v1979 = vshrl.u32 %v1826, 16
          %v1981 = vrot.slane %v1979, 7
          %v1983 = vshrl.u32 %v1827, 16
          %v1985 = vrot.slane %v1983, 7
          %v1986 = vshll.u32 %v1827, 16
          %v1988 = vor.u32 %v1985, %v1986
          %v1989 = vsel %vm514, %v1981, %v1988
          %v1991 = vshrl.u32 %v1828, 16
          %v1993 = vrot.slane %v1991, 7
          %v1995 = vshrl.u32 %v1829, 16
          %v1997 = vrot.slane %v1995, 7
          %v1998 = vshll.u32 %v1829, 16
          %v2000 = vor.u32 %v1997, %v1998
          %v2001 = vsel %vm514, %v1993, %v2000
          %v2003 = vshrl.u32 %v1830, 16
          %v2005 = vrot.slane %v2003, 7
          %v2007 = vshrl.u32 %v1831, 16
          %v2009 = vrot.slane %v2007, 7
          %v2010 = vshll.u32 %v1831, 16
          %v2012 = vor.u32 %v2009, %v2010
          %v2013 = vsel %vm514, %v2005, %v2012
          %v2015 = vshrl.u32 %v1832, 16
          %v2017 = vrot.slane %v2015, 7
          %v2019 = vshrl.u32 %v1833, 16
          %v2021 = vrot.slane %v2019, 7
          %v2022 = vshll.u32 %v1833, 16
          %v2024 = vor.u32 %v2021, %v2022
          %v2025 = vsel %vm514, %v2017, %v2024
          %2026 = vrot.lane.b32.xlu0 %v1845, 24
          %v2027 = vpop.permute.xlu0 %2026
          %2028 = vrot.lane.b32.xlu0 %v1857, 24
          %v2029 = vpop.permute.xlu0 %2028
          %2030 = vrot.lane.b32.xlu0 %v1869, 24
          %v2031 = vpop.permute.xlu0 %2030
          %2032 = vrot.lane.b32.xlu0 %v1881, 24
          %v2033 = vpop.permute.xlu0 %2032
          %2034 = vrot.lane.b32.xlu0 %v1893, 24
          %v2035 = vpop.permute.xlu0 %2034
          %2036 = vrot.lane.b32.xlu0 %v1905, 24
          %v2037 = vpop.permute.xlu0 %2036
          %2038 = vrot.lane.b32.xlu0 %v1917, 24
          %v2039 = vpop.permute.xlu0 %2038
          %2040 = vrot.lane.b32.xlu0 %v1929, 24
          %v2041 = vpop.permute.xlu0 %2040
          %2042 = vrot.lane.b32.xlu0 %v1941, 24
          %v2043 = vpop.permute.xlu0 %2042
          %2044 = vrot.lane.b32.xlu0 %v1953, 24
          %v2045 = vpop.permute.xlu0 %2044
          %2046 = vrot.lane.b32.xlu0 %v1965, 24
          %v2047 = vpop.permute.xlu0 %2046
          %2048 = vrot.lane.b32.xlu0 %v1977, 24
          %v2049 = vpop.permute.xlu0 %2048
          %2050 = vrot.lane.b32.xlu0 %v1989, 24
          %v2051 = vpop.permute.xlu0 %2050
          %2052 = vrot.lane.b32.xlu0 %v2001, 24
          %v2053 = vpop.permute.xlu0 %2052
          %2054 = vrot.lane.b32.xlu0 %v2013, 24
          %v2055 = vpop.permute.xlu0 %2054
          %2056 = vrot.lane.b32.xlu0 %v2025, 24
          %v2057 = vpop.permute.xlu0 %2056
          %vm2074 = vcmask 228544
          %2075 = vst.msk [vmem:[#allocation3] sm:$0xff] %vm2074, %v2027
          %2076 = vst.msk [vmem:[#allocation3 + $0x8] sm:$0xff] %vm2074, %v2029
          %2077 = vst.msk [vmem:[#allocation3 + $0x10] sm:$0xff] %vm2074, %v2031
          %2078 = vst.msk [vmem:[#allocation3 + $0x18] sm:$0xff] %vm2074, %v2033
          %2079 = vst.msk [vmem:[#allocation3 + $0x20] sm:$0xff] %vm2074, %v2035
          %2080 = vst.msk [vmem:[#allocation3 + $0x28] sm:$0xff] %vm2074, %v2037
          %2081 = vst.msk [vmem:[#allocation3 + $0x30] sm:$0xff] %vm2074, %v2039
          %2082 = vst.msk [vmem:[#allocation3 + $0x38] sm:$0xff] %vm2074, %v2041
          %2083 = vst.msk [vmem:[#allocation3 + $0x40] sm:$0xff] %vm2074, %v2043
          %2084 = vst.msk [vmem:[#allocation3 + $0x48] sm:$0xff] %vm2074, %v2045
          %2085 = vst.msk [vmem:[#allocation3 + $0x50] sm:$0xff] %vm2074, %v2047
          %2086 = vst.msk [vmem:[#allocation3 + $0x58] sm:$0xff] %vm2074, %v2049
          %2087 = vst.msk [vmem:[#allocation3 + $0x60] sm:$0xff] %vm2074, %v2051
          %2088 = vst.msk [vmem:[#allocation3 + $0x68] sm:$0xff] %vm2074, %v2053
          %2089 = vst.msk [vmem:[#allocation3 + $0x70] sm:$0xff] %vm2074, %v2055
          %2090 = vst.msk [vmem:[#allocation3 + $0x78] sm:$0xff] %vm2074, %v2057
          %v2091 = vld [vmem:[%s1801 + $0x8] sm:$0xff]
          %v2092 = vld [vmem:[%s1801 + $0x20] sm:$0xff]
          %v2093 = vld [vmem:[%s1801 + $0x38] sm:$0xff]
          %v2094 = vld [vmem:[%s1801 + $0x50] sm:$0xff]
          %v2095 = vld [vmem:[%s1801 + $0x68] sm:$0xff]
          %v2096 = vld [vmem:[%s1801 + $0x80] sm:$0xff]
          %v2097 = vld [vmem:[%s1801 + $0x98] sm:$0xff]
          %v2098 = vld [vmem:[%s1801 + $0xb0] sm:$0xff]
          %v2099 = vld [vmem:[%s1801 + $0xc8] sm:$0xff]
          %v2100 = vld [vmem:[%s1801 + $0xe0] sm:$0xff]
          %v2101 = vld [vmem:[%s1801 + $0xf8] sm:$0xff]
          %v2102 = vld [vmem:[%s1801 + $0x110] sm:$0xff]
          %v2103 = vld [vmem:[%s1801 + $0x128] sm:$0xff]
          %v2104 = vld [vmem:[%s1801 + $0x140] sm:$0xff]
          %v2105 = vld [vmem:[%s1801 + $0x158] sm:$0xff]
          %v2106 = vld [vmem:[%s1801 + $0x170] sm:$0xff]
          %2123 = vrot.lane.b32.xlu0 %v2091, 28
          %v2124 = vpop.permute.xlu0 %2123
          %2125 = vrot.lane.b32.xlu0 %v2092, 28
          %v2126 = vpop.permute.xlu0 %2125
          %2127 = vrot.lane.b32.xlu0 %v2093, 28
          %v2128 = vpop.permute.xlu0 %2127
          %2129 = vrot.lane.b32.xlu0 %v2094, 28
          %v2130 = vpop.permute.xlu0 %2129
          %2131 = vrot.lane.b32.xlu0 %v2095, 28
          %v2132 = vpop.permute.xlu0 %2131
          %2133 = vrot.lane.b32.xlu0 %v2096, 28
          %v2134 = vpop.permute.xlu0 %2133
          %2135 = vrot.lane.b32.xlu0 %v2097, 28
          %v2136 = vpop.permute.xlu0 %2135
          %2137 = vrot.lane.b32.xlu0 %v2098, 28
          %v2138 = vpop.permute.xlu0 %2137
          %2139 = vrot.lane.b32.xlu0 %v2099, 28
          %v2140 = vpop.permute.xlu0 %2139
          %2141 = vrot.lane.b32.xlu0 %v2100, 28
          %v2142 = vpop.permute.xlu0 %2141
          %2143 = vrot.lane.b32.xlu0 %v2101, 28
          %v2144 = vpop.permute.xlu0 %2143
          %2145 = vrot.lane.b32.xlu0 %v2102, 28
          %v2146 = vpop.permute.xlu0 %2145
          %2147 = vrot.lane.b32.xlu0 %v2103, 28
          %v2148 = vpop.permute.xlu0 %2147
          %2149 = vrot.lane.b32.xlu0 %v2104, 28
          %v2150 = vpop.permute.xlu0 %2149
          %2151 = vrot.lane.b32.xlu0 %v2105, 28
          %v2152 = vpop.permute.xlu0 %2151
          %2153 = vrot.lane.b32.xlu0 %v2106, 28
          %v2154 = vpop.permute.xlu0 %2153
          %vm2171 = vcmask 261344
          %2172 = vst.msk [vmem:[#allocation3] sm:$0xff] %vm2171, %v2124
          %2173 = vst.msk [vmem:[#allocation3 + $0x8] sm:$0xff] %vm2171, %v2126
          %2174 = vst.msk [vmem:[#allocation3 + $0x10] sm:$0xff] %vm2171, %v2128
          %2175 = vst.msk [vmem:[#allocation3 + $0x18] sm:$0xff] %vm2171, %v2130
          %2176 = vst.msk [vmem:[#allocation3 + $0x20] sm:$0xff] %vm2171, %v2132
          %2177 = vst.msk [vmem:[#allocation3 + $0x28] sm:$0xff] %vm2171, %v2134
          %2178 = vst.msk [vmem:[#allocation3 + $0x30] sm:$0xff] %vm2171, %v2136
          %2179 = vst.msk [vmem:[#allocation3 + $0x38] sm:$0xff] %vm2171, %v2138
          %2180 = vst.msk [vmem:[#allocation3 + $0x40] sm:$0xff] %vm2171, %v2140
          %2181 = vst.msk [vmem:[#allocation3 + $0x48] sm:$0xff] %vm2171, %v2142
          %2182 = vst.msk [vmem:[#allocation3 + $0x50] sm:$0xff] %vm2171, %v2144
          %2183 = vst.msk [vmem:[#allocation3 + $0x58] sm:$0xff] %vm2171, %v2146
          %2184 = vst.msk [vmem:[#allocation3 + $0x60] sm:$0xff] %vm2171, %v2148
          %2185 = vst.msk [vmem:[#allocation3 + $0x68] sm:$0xff] %vm2171, %v2150
          %2186 = vst.msk [vmem:[#allocation3 + $0x70] sm:$0xff] %vm2171, %v2152
          %2187 = vst.msk [vmem:[#allocation3 + $0x78] sm:$0xff] %vm2171, %v2154
          %v2188 = vld [vmem:[%s1801 + $0x8] sm:$0xff]
          %v2189 = vld [vmem:[%s1801 + $0x10] sm:$0x1]
          %v2190 = vld [vmem:[%s1801 + $0x20] sm:$0xff]
          %v2191 = vld [vmem:[%s1801 + $0x28] sm:$0x1]
          %v2192 = vld [vmem:[%s1801 + $0x38] sm:$0xff]
          %v2193 = vld [vmem:[%s1801 + $0x40] sm:$0x1]
          %v2194 = vld [vmem:[%s1801 + $0x50] sm:$0xff]
          %v2195 = vld [vmem:[%s1801 + $0x58] sm:$0x1]
          %v2196 = vld [vmem:[%s1801 + $0x68] sm:$0xff]
          %v2197 = vld [vmem:[%s1801 + $0x70] sm:$0x1]
          %v2198 = vld [vmem:[%s1801 + $0x80] sm:$0xff]
          %v2199 = vld [vmem:[%s1801 + $0x88] sm:$0x1]
          %v2200 = vld [vmem:[%s1801 + $0x98] sm:$0xff]
          %v2201 = vld [vmem:[%s1801 + $0xa0] sm:$0x1]
          %v2202 = vld [vmem:[%s1801 + $0xb0] sm:$0xff]
          %v2203 = vld [vmem:[%s1801 + $0xb8] sm:$0x1]
          %v2204 = vld [vmem:[%s1801 + $0xc8] sm:$0xff]
          %v2205 = vld [vmem:[%s1801 + $0xd0] sm:$0x1]
          %v2206 = vld [vmem:[%s1801 + $0xe0] sm:$0xff]
          %v2207 = vld [vmem:[%s1801 + $0xe8] sm:$0x1]
          %v2208 = vld [vmem:[%s1801 + $0xf8] sm:$0xff]
          %v2209 = vld [vmem:[%s1801 + $0x100] sm:$0x1]
          %v2210 = vld [vmem:[%s1801 + $0x110] sm:$0xff]
          %v2211 = vld [vmem:[%s1801 + $0x118] sm:$0x1]
          %v2212 = vld [vmem:[%s1801 + $0x128] sm:$0xff]
          %v2213 = vld [vmem:[%s1801 + $0x130] sm:$0x1]
          %v2214 = vld [vmem:[%s1801 + $0x140] sm:$0xff]
          %v2215 = vld [vmem:[%s1801 + $0x148] sm:$0x1]
          %v2216 = vld [vmem:[%s1801 + $0x158] sm:$0xff]
          %v2217 = vld [vmem:[%s1801 + $0x160] sm:$0x1]
          %v2218 = vld [vmem:[%s1801 + $0x170] sm:$0xff]
          %v2219 = vld [vmem:[%s1801 + $0x178] sm:$0x1]
          %v2221 = vshrl.u32 %v2188, 16
          %v2223 = vshll.u32 %v2188, 16
          %v2225 = vrot.slane %v2223, 1
          %v2226 = vor.u32 %v2221, %v2225
          %v2228 = vshll.u32 %v2189, 16
          %v2230 = vrot.slane %v2228, 1
          %v2231 = vsel %vm868, %v2226, %v2230
          %v2233 = vshrl.u32 %v2190, 16
          %v2235 = vshll.u32 %v2190, 16
          %v2237 = vrot.slane %v2235, 1
          %v2238 = vor.u32 %v2233, %v2237
          %v2240 = vshll.u32 %v2191, 16
          %v2242 = vrot.slane %v2240, 1
          %v2243 = vsel %vm868, %v2238, %v2242
          %v2245 = vshrl.u32 %v2192, 16
          %v2247 = vshll.u32 %v2192, 16
          %v2249 = vrot.slane %v2247, 1
          %v2250 = vor.u32 %v2245, %v2249
          %v2252 = vshll.u32 %v2193, 16
          %v2254 = vrot.slane %v2252, 1
          %v2255 = vsel %vm868, %v2250, %v2254
          %v2257 = vshrl.u32 %v2194, 16
          %v2259 = vshll.u32 %v2194, 16
          %v2261 = vrot.slane %v2259, 1
          %v2262 = vor.u32 %v2257, %v2261
          %v2264 = vshll.u32 %v2195, 16
          %v2266 = vrot.slane %v2264, 1
          %v2267 = vsel %vm868, %v2262, %v2266
          %v2269 = vshrl.u32 %v2196, 16
          %v2271 = vshll.u32 %v2196, 16
          %v2273 = vrot.slane %v2271, 1
          %v2274 = vor.u32 %v2269, %v2273
          %v2276 = vshll.u32 %v2197, 16
          %v2278 = vrot.slane %v2276, 1
          %v2279 = vsel %vm868, %v2274, %v2278
          %v2281 = vshrl.u32 %v2198, 16
          %v2283 = vshll.u32 %v2198, 16
          %v2285 = vrot.slane %v2283, 1
          %v2286 = vor.u32 %v2281, %v2285
          %v2288 = vshll.u32 %v2199, 16
          %v2290 = vrot.slane %v2288, 1
          %v2291 = vsel %vm868, %v2286, %v2290
          %v2293 = vshrl.u32 %v2200, 16
          %v2295 = vshll.u32 %v2200, 16
          %v2297 = vrot.slane %v2295, 1
          %v2298 = vor.u32 %v2293, %v2297
          %v2300 = vshll.u32 %v2201, 16
          %v2302 = vrot.slane %v2300, 1
          %v2303 = vsel %vm868, %v2298, %v2302
          %v2305 = vshrl.u32 %v2202, 16
          %v2307 = vshll.u32 %v2202, 16
          %v2309 = vrot.slane %v2307, 1
          %v2310 = vor.u32 %v2305, %v2309
          %v2312 = vshll.u32 %v2203, 16
          %v2314 = vrot.slane %v2312, 1
          %v2315 = vsel %vm868, %v2310, %v2314
          %v2317 = vshrl.u32 %v2204, 16
          %v2319 = vshll.u32 %v2204, 16
          %v2321 = vrot.slane %v2319, 1
          %v2322 = vor.u32 %v2317, %v2321
          %v2324 = vshll.u32 %v2205, 16
          %v2326 = vrot.slane %v2324, 1
          %v2327 = vsel %vm868, %v2322, %v2326
          %v2329 = vshrl.u32 %v2206, 16
          %v2331 = vshll.u32 %v2206, 16
          %v2333 = vrot.slane %v2331, 1
          %v2334 = vor.u32 %v2329, %v2333
          %v2336 = vshll.u32 %v2207, 16
          %v2338 = vrot.slane %v2336, 1
          %v2339 = vsel %vm868, %v2334, %v2338
          %v2341 = vshrl.u32 %v2208, 16
          %v2343 = vshll.u32 %v2208, 16
          %v2345 = vrot.slane %v2343, 1
          %v2346 = vor.u32 %v2341, %v2345
          %v2348 = vshll.u32 %v2209, 16
          %v2350 = vrot.slane %v2348, 1
          %v2351 = vsel %vm868, %v2346, %v2350
          %v2353 = vshrl.u32 %v2210, 16
          %v2355 = vshll.u32 %v2210, 16
          %v2357 = vrot.slane %v2355, 1
          %v2358 = vor.u32 %v2353, %v2357
          %v2360 = vshll.u32 %v2211, 16
          %v2362 = vrot.slane %v2360, 1
          %v2363 = vsel %vm868, %v2358, %v2362
          %v2365 = vshrl.u32 %v2212, 16
          %v2367 = vshll.u32 %v2212, 16
          %v2369 = vrot.slane %v2367, 1
          %v2370 = vor.u32 %v2365, %v2369
          %v2372 = vshll.u32 %v2213, 16
          %v2374 = vrot.slane %v2372, 1
          %v2375 = vsel %vm868, %v2370, %v2374
          %v2377 = vshrl.u32 %v2214, 16
          %v2379 = vshll.u32 %v2214, 16
          %v2381 = vrot.slane %v2379, 1
          %v2382 = vor.u32 %v2377, %v2381
          %v2384 = vshll.u32 %v2215, 16
          %v2386 = vrot.slane %v2384, 1
          %v2387 = vsel %vm868, %v2382, %v2386
          %v2389 = vshrl.u32 %v2216, 16
          %v2391 = vshll.u32 %v2216, 16
          %v2393 = vrot.slane %v2391, 1
          %v2394 = vor.u32 %v2389, %v2393
          %v2396 = vshll.u32 %v2217, 16
          %v2398 = vrot.slane %v2396, 1
          %v2399 = vsel %vm868, %v2394, %v2398
          %v2401 = vshrl.u32 %v2218, 16
          %v2403 = vshll.u32 %v2218, 16
          %v2405 = vrot.slane %v2403, 1
          %v2406 = vor.u32 %v2401, %v2405
          %v2408 = vshll.u32 %v2219, 16
          %v2410 = vrot.slane %v2408, 1
          %v2411 = vsel %vm868, %v2406, %v2410
          %2412 = vrot.lane.b32.xlu0 %v2231, 32
          %v2413 = vpop.permute.xlu0 %2412
          %2414 = vrot.lane.b32.xlu0 %v2243, 32
          %v2415 = vpop.permute.xlu0 %2414
          %2416 = vrot.lane.b32.xlu0 %v2255, 32
          %v2417 = vpop.permute.xlu0 %2416
          %2418 = vrot.lane.b32.xlu0 %v2267, 32
          %v2419 = vpop.permute.xlu0 %2418
          %2420 = vrot.lane.b32.xlu0 %v2279, 32
          %v2421 = vpop.permute.xlu0 %2420
          %2422 = vrot.lane.b32.xlu0 %v2291, 32
          %v2423 = vpop.permute.xlu0 %2422
          %2424 = vrot.lane.b32.xlu0 %v2303, 32
          %v2425 = vpop.permute.xlu0 %2424
          %2426 = vrot.lane.b32.xlu0 %v2315, 32
          %v2427 = vpop.permute.xlu0 %2426
          %2428 = vrot.lane.b32.xlu0 %v2327, 32
          %v2429 = vpop.permute.xlu0 %2428
          %2430 = vrot.lane.b32.xlu0 %v2339, 32
          %v2431 = vpop.permute.xlu0 %2430
          %2432 = vrot.lane.b32.xlu0 %v2351, 32
          %v2433 = vpop.permute.xlu0 %2432
          %2434 = vrot.lane.b32.xlu0 %v2363, 32
          %v2435 = vpop.permute.xlu0 %2434
          %2436 = vrot.lane.b32.xlu0 %v2375, 32
          %v2437 = vpop.permute.xlu0 %2436
          %2438 = vrot.lane.b32.xlu0 %v2387, 32
          %v2439 = vpop.permute.xlu0 %2438
          %2440 = vrot.lane.b32.xlu0 %v2399, 32
          %v2441 = vpop.permute.xlu0 %2440
          %2442 = vrot.lane.b32.xlu0 %v2411, 32
          %v2443 = vpop.permute.xlu0 %2442
          %vm2460 = vcmask 294144
          %2461 = vst.msk [vmem:[#allocation3] sm:$0xff] %vm2460, %v2413
          %2462 = vst.msk [vmem:[#allocation3 + $0x8] sm:$0xff] %vm2460, %v2415
          %2463 = vst.msk [vmem:[#allocation3 + $0x10] sm:$0xff] %vm2460, %v2417
          %2464 = vst.msk [vmem:[#allocation3 + $0x18] sm:$0xff] %vm2460, %v2419
          %2465 = vst.msk [vmem:[#allocation3 + $0x20] sm:$0xff] %vm2460, %v2421
          %2466 = vst.msk [vmem:[#allocation3 + $0x28] sm:$0xff] %vm2460, %v2423
          %2467 = vst.msk [vmem:[#allocation3 + $0x30] sm:$0xff] %vm2460, %v2425
          %2468 = vst.msk [vmem:[#allocation3 + $0x38] sm:$0xff] %vm2460, %v2427
          %2469 = vst.msk [vmem:[#allocation3 + $0x40] sm:$0xff] %vm2460, %v2429
          %2470 = vst.msk [vmem:[#allocation3 + $0x48] sm:$0xff] %vm2460, %v2431
          %2471 = vst.msk [vmem:[#allocation3 + $0x50] sm:$0xff] %vm2460, %v2433
          %2472 = vst.msk [vmem:[#allocation3 + $0x58] sm:$0xff] %vm2460, %v2435
          %2473 = vst.msk [vmem:[#allocation3 + $0x60] sm:$0xff] %vm2460, %v2437
          %2474 = vst.msk [vmem:[#allocation3 + $0x68] sm:$0xff] %vm2460, %v2439
          %2475 = vst.msk [vmem:[#allocation3 + $0x70] sm:$0xff] %vm2460, %v2441
          %2476 = vst.msk [vmem:[#allocation3 + $0x78] sm:$0xff] %vm2460, %v2443
        $region36: #{tpu_custom_call.1} parent=31 // pred_fallthru
          _
        %v2477 = vld [vmem:[#allocation3] sm:$0xff]
        %v2478 = vld [vmem:[#allocation3 + $0x8] sm:$0xff]
        %v2479 = vld [vmem:[#allocation3 + $0x10] sm:$0xff]
        %v2480 = vld [vmem:[#allocation3 + $0x18] sm:$0xff]
        %v2481 = vld [vmem:[#allocation3 + $0x20] sm:$0xff]
        %v2482 = vld [vmem:[#allocation3 + $0x28] sm:$0xff]
        %v2483 = vld [vmem:[#allocation3 + $0x30] sm:$0xff]
        %v2484 = vld [vmem:[#allocation3 + $0x38] sm:$0xff]
        %v2485 = vld [vmem:[#allocation3 + $0x40] sm:$0xff]
        %v2486 = vld [vmem:[#allocation3 + $0x48] sm:$0xff]
        %v2487 = vld [vmem:[#allocation3 + $0x50] sm:$0xff]
        %v2488 = vld [vmem:[#allocation3 + $0x58] sm:$0xff]
        %v2489 = vld [vmem:[#allocation3 + $0x60] sm:$0xff]
        %v2490 = vld [vmem:[#allocation3 + $0x68] sm:$0xff]
        %v2491 = vld [vmem:[#allocation3 + $0x70] sm:$0xff]
        %v2492 = vld [vmem:[#allocation3 + $0x78] sm:$0xff]
        %v2493 = vld [vmem:[%s284] sm:$0xf]
        %v2494 = vld [vmem:[%s284 + $0x4] sm:$0xf]
        %v2495 = vld [vmem:[%s284 + $0x8] sm:$0xf]
        %v2496 = vld [vmem:[%s284 + $0xc] sm:$0xf]
        %v2497 = vld [vmem:[%s284 + $0x10] sm:$0x3]
        %v2498 = vld [vmem:[%s287] sm:$0x1]
        %v2500 = vlaneseq
        %v2501 = vshrl.u32 %v2500, 7
        %v2502 = vsub.s32 0, %v2501
        %v2503 = vrot.slane %v2498, %v2502
        %v2510 = vunpack.c.l.b16 %v2493
        %v2511 = vunpack.c.l.b16 %v2494
        %v2512 = vunpack.c.l.b16 %v2495
        %v2513 = vunpack.c.l.b16 %v2496
        %v2514 = vunpack.c.l.b16 %v2497
        %v2515 = vpack.c.b16 %v2511, %v2510
        %v2516 = vpack.c.b16 %v2513, %v2512
        %v2517 = vpack.c.b16 %v2514, %v2514
        %vm2520 = vcmask 293888
        %v2522 = vsel %vm2520, %v2477, 0
        %v2525 = vsel %vm2520, %v2478, 0
        %v2528 = vsel %vm2520, %v2479, 0
        %v2531 = vsel %vm2520, %v2480, 0
        %v2534 = vsel %vm2520, %v2481, 0
        %v2537 = vsel %vm2520, %v2482, 0
        %v2540 = vsel %vm2520, %v2483, 0
        %v2543 = vsel %vm2520, %v2484, 0
        %v2546 = vsel %vm2520, %v2485, 0
        %v2549 = vsel %vm2520, %v2486, 0
        %v2552 = vsel %vm2520, %v2487, 0
        %v2555 = vsel %vm2520, %v2488, 0
        %v2558 = vsel %vm2520, %v2489, 0
        %v2561 = vsel %vm2520, %v2490, 0
        %v2564 = vsel %vm2520, %v2491, 0
        %v2567 = vsel %vm2520, %v2492, 0
        %vm2569 = vcmask 1041408
        %v2571 = vsel %vm2569, %v2517, 0
        %2573 = vmatprep.subr.bf16.mxu0 0
        %2574 = vmatpush1.bf16.msra.mxu0 %v2515
        %2575 = vmatprep.subr.bf16.mxu0 0
        %2576 = vmatpush1.bf16.msra.mxu0 %v2516
        %2577 = vmatprep.subr.bf16.mxu0 0
        %2578 = vmatpush1.bf16.msra.mxu0 %v2571
        %2579 = vmatprep.subr.bf16.mxu0 0
        %2580 = vmatpush1.bf16.msra.mxu0 0
        %2581 = vmatprep.subr.bf16.mxu0 0
        %2582 = vmatpush1.bf16.msra.mxu0 0
        %2583 = vmatprep.subr.bf16.mxu0 0
        %2584 = vmatpush1.bf16.msra.mxu0 0
        %2585 = vmatprep.subr.bf16.mxu0 0
        %2586 = vmatpush1.bf16.msra.mxu0 0
        %2587 = vmatprep.subr.bf16.mxu0 0
        %2588 = vmatpush1.bf16.msra.mxu0 0
        %2589 = vmatprep.subr.bf16.mxu0 0
        %2590 = vmatpush1.bf16.msra.mxu0 0
        %2591 = vmatprep.subr.bf16.mxu0 0
        %2592 = vmatpush1.bf16.msra.mxu0 0
        %2593 = vmatprep.subr.bf16.mxu0 0
        %2594 = vmatpush1.bf16.msra.mxu0 0
        %2595 = vmatprep.subr.bf16.mxu0 0
        %2596 = vmatpush1.bf16.msra.mxu0 0
        %2597 = vmatprep.subr.bf16.mxu0 0
        %2598 = vmatpush1.bf16.msra.mxu0 0
        %2599 = vmatprep.subr.bf16.mxu0 0
        %2600 = vmatpush1.bf16.msra.mxu0 0
        %2601 = vmatprep.subr.bf16.mxu0 0
        %2602 = vmatpush1.bf16.msra.mxu0 0
        %2603 = vmatprep.subr.bf16.mxu0 0
        %2604 = vmatpush1.bf16.msra.mxu0 0
        %2605 = vmatprep.mubr.bf16.mxu0 0
        %2606 = vmatmul.mubr.bf16.gmra.mrb[0].mxu0 %v2522
        %v2607 = vpop.f32.mrb[0].mxu0
        %v2608 = vadd.f32 %v2503, %v2607
        %v2609 = vpop.f32.mrb[0].mxu0
        %v2610 = vpop.f32.mrb[0].mxu0
        %v2611 = vadd.f32 %v2503, %v2610
        %v2612 = vpop.f32.mrb[0].mxu0
        %2613 = vmatprep.mubr.bf16.mxu0 0
        %2614 = vmatmul.mubr.bf16.gmra.mrb[0].mxu0 %v2525
        %v2615 = vpop.f32.mrb[0].mxu0
        %v2616 = vadd.f32 %v2503, %v2615
        %v2617 = vpop.f32.mrb[0].mxu0
        %v2618 = vpop.f32.mrb[0].mxu0
        %v2619 = vadd.f32 %v2503, %v2618
        %v2620 = vpop.f32.mrb[0].mxu0
        %2621 = vmatprep.mubr.bf16.mxu0 0
        %2622 = vmatmul.mubr.bf16.gmra.mrb[0].mxu0 %v2528
        %v2623 = vpop.f32.mrb[0].mxu0
        %v2624 = vadd.f32 %v2503, %v2623
        %v2625 = vpop.f32.mrb[0].mxu0
        %v2626 = vpop.f32.mrb[0].mxu0
        %v2627 = vadd.f32 %v2503, %v2626
        %v2628 = vpop.f32.mrb[0].mxu0
        %2629 = vmatprep.mubr.bf16.mxu0 0
        %2630 = vmatmul.mubr.bf16.gmra.mrb[0].mxu0 %v2531
        %v2631 = vpop.f32.mrb[0].mxu0
        %v2632 = vadd.f32 %v2503, %v2631
        %v2633 = vpop.f32.mrb[0].mxu0
        %v2634 = vpop.f32.mrb[0].mxu0
        %v2635 = vadd.f32 %v2503, %v2634
        %v2636 = vpop.f32.mrb[0].mxu0
        %2637 = vmatprep.mubr.bf16.mxu0 0
        %2638 = vmatmul.mubr.bf16.gmra.mrb[0].mxu0 %v2534
        %v2639 = vpop.f32.mrb[0].mxu0
        %v2640 = vadd.f32 %v2503, %v2639
        %v2641 = vpop.f32.mrb[0].mxu0
        %v2642 = vpop.f32.mrb[0].mxu0
        %v2643 = vadd.f32 %v2503, %v2642
        %v2644 = vpop.f32.mrb[0].mxu0
        %2645 = vmatprep.mubr.bf16.mxu0 0
        %2646 = vmatmul.mubr.bf16.gmra.mrb[0].mxu0 %v2537
        %v2647 = vpop.f32.mrb[0].mxu0
        %v2648 = vadd.f32 %v2503, %v2647
        %v2649 = vpop.f32.mrb[0].mxu0
        %v2650 = vpop.f32.mrb[0].mxu0
        %v2651 = vadd.f32 %v2503, %v2650
        %v2652 = vpop.f32.mrb[0].mxu0
        %2653 = vmatprep.mubr.bf16.mxu0 0
        %2654 = vmatmul.mubr.bf16.gmra.mrb[0].mxu0 %v2540
        %v2655 = vpop.f32.mrb[0].mxu0
        %v2656 = vadd.f32 %v2503, %v2655
        %v2657 = vpop.f32.mrb[0].mxu0
        %v2658 = vpop.f32.mrb[0].mxu0
        %v2659 = vadd.f32 %v2503, %v2658
        %v2660 = vpop.f32.mrb[0].mxu0
        %2661 = vmatprep.mubr.bf16.mxu0 0
        %2662 = vmatmul.mubr.bf16.gmra.mrb[0].mxu0 %v2543
        %v2663 = vpop.f32.mrb[0].mxu0
        %v2664 = vadd.f32 %v2503, %v2663
        %v2665 = vpop.f32.mrb[0].mxu0
        %v2666 = vpop.f32.mrb[0].mxu0
        %v2667 = vadd.f32 %v2503, %v2666
        %v2668 = vpop.f32.mrb[0].mxu0
        %2669 = vmatprep.mubr.bf16.mxu0 0
        %2670 = vmatmul.mubr.bf16.gmra.mrb[0].mxu0 %v2546
        %v2671 = vpop.f32.mrb[0].mxu0
        %v2672 = vadd.f32 %v2503, %v2671
        %v2673 = vpop.f32.mrb[0].mxu0
        %v2674 = vpop.f32.mrb[0].mxu0
        %v2675 = vadd.f32 %v2503, %v2674
        %v2676 = vpop.f32.mrb[0].mxu0
        %2677 = vmatprep.mubr.bf16.mxu0 0
        %2678 = vmatmul.mubr.bf16.gmra.mrb[0].mxu0 %v2549
        %v2679 = vpop.f32.mrb[0].mxu0
        %v2680 = vadd.f32 %v2503, %v2679
        %v2681 = vpop.f32.mrb[0].mxu0
        %v2682 = vpop.f32.mrb[0].mxu0
        %v2683 = vadd.f32 %v2503, %v2682
        %v2684 = vpop.f32.mrb[0].mxu0
        %2685 = vmatprep.mubr.bf16.mxu0 0
        %2686 = vmatmul.mubr.bf16.gmra.mrb[0].mxu0 %v2552
        %v2687 = vpop.f32.mrb[0].mxu0
        %v2688 = vadd.f32 %v2503, %v2687
        %v2689 = vpop.f32.mrb[0].mxu0
        %v2690 = vpop.f32.mrb[0].mxu0
        %v2691 = vadd.f32 %v2503, %v2690
        %v2692 = vpop.f32.mrb[0].mxu0
        %2693 = vmatprep.mubr.bf16.mxu0 0
        %2694 = vmatmul.mubr.bf16.gmra.mrb[0].mxu0 %v2555
        %v2695 = vpop.f32.mrb[0].mxu0
        %v2696 = vadd.f32 %v2503, %v2695
        %v2697 = vpop.f32.mrb[0].mxu0
        %v2698 = vpop.f32.mrb[0].mxu0
        %v2699 = vadd.f32 %v2503, %v2698
        %v2700 = vpop.f32.mrb[0].mxu0
        %2701 = vmatprep.mubr.bf16.mxu0 0
        %2702 = vmatmul.mubr.bf16.gmra.mrb[0].mxu0 %v2558
        %v2703 = vpop.f32.mrb[0].mxu0
        %v2704 = vadd.f32 %v2503, %v2703
        %v2705 = vpop.f32.mrb[0].mxu0
        %v2706 = vpop.f32.mrb[0].mxu0
        %v2707 = vadd.f32 %v2503, %v2706
        %v2708 = vpop.f32.mrb[0].mxu0
        %2709 = vmatprep.mubr.bf16.mxu0 0
        %2710 = vmatmul.mubr.bf16.gmra.mrb[0].mxu0 %v2561
        %v2711 = vpop.f32.mrb[0].mxu0
        %v2712 = vadd.f32 %v2503, %v2711
        %v2713 = vpop.f32.mrb[0].mxu0
        %v2714 = vpop.f32.mrb[0].mxu0
        %v2715 = vadd.f32 %v2503, %v2714
        %v2716 = vpop.f32.mrb[0].mxu0
        %2717 = vmatprep.mubr.bf16.mxu0 0
        %2718 = vmatmul.mubr.bf16.gmra.mrb[0].mxu0 %v2564
        %v2719 = vpop.f32.mrb[0].mxu0
        %v2720 = vadd.f32 %v2503, %v2719
        %v2721 = vpop.f32.mrb[0].mxu0
        %v2722 = vpop.f32.mrb[0].mxu0
        %v2723 = vadd.f32 %v2503, %v2722
        %v2724 = vpop.f32.mrb[0].mxu0
        %2725 = vmatprep.mubr.bf16.mxu0 0
        %2726 = vmatmul.mubr.bf16.gmra.mrb[0].mxu0 %v2567
        %v2727 = vpop.f32.mrb[0].mxu0
        %v2728 = vadd.f32 %v2503, %v2727
        %v2729 = vpop.f32.mrb[0].mxu0
        %v2730 = vpop.f32.mrb[0].mxu0
        %v2731 = vadd.f32 %v2503, %v2730
        %v2732 = vpop.f32.mrb[0].mxu0
        %2733 = vdwg.mxu0
        %v2734 = vsub.f32 0.0, %v2608
        %v2735 = vsub.f32 0.0, %v2611
        %v2736 = vsub.f32 0.0, %v2616
        %v2737 = vsub.f32 0.0, %v2619
        %v2738 = vsub.f32 0.0, %v2624
        %v2739 = vsub.f32 0.0, %v2627
        %v2740 = vsub.f32 0.0, %v2632
        %v2741 = vsub.f32 0.0, %v2635
        %v2742 = vsub.f32 0.0, %v2640
        %v2743 = vsub.f32 0.0, %v2643
        %v2744 = vsub.f32 0.0, %v2648
        %v2745 = vsub.f32 0.0, %v2651
        %v2746 = vsub.f32 0.0, %v2656
        %v2747 = vsub.f32 0.0, %v2659
        %v2748 = vsub.f32 0.0, %v2664
        %v2749 = vsub.f32 0.0, %v2667
        %v2750 = vsub.f32 0.0, %v2672
        %v2751 = vsub.f32 0.0, %v2675
        %v2752 = vsub.f32 0.0, %v2680
        %v2753 = vsub.f32 0.0, %v2683
        %v2754 = vsub.f32 0.0, %v2688
        %v2755 = vsub.f32 0.0, %v2691
        %v2756 = vsub.f32 0.0, %v2696
        %v2757 = vsub.f32 0.0, %v2699
        %v2758 = vsub.f32 0.0, %v2704
        %v2759 = vsub.f32 0.0, %v2707
        %v2760 = vsub.f32 0.0, %v2712
        %v2761 = vsub.f32 0.0, %v2715
        %v2762 = vsub.f32 0.0, %v2720
        %v2763 = vsub.f32 0.0, %v2723
        %v2764 = vsub.f32 0.0, %v2728
        %v2765 = vsub.f32 0.0, %v2731
        %v2766 = vmul.f32 %v2734, 1.442695
        %v2767 = vpow.pop %v2766
        %v2768 = vmul.f32 %v2735, 1.442695
        %v2769 = vpow.pop %v2768
        %v2770 = vmul.f32 %v2736, 1.442695
        %v2771 = vpow.pop %v2770
        %v2772 = vmul.f32 %v2737, 1.442695
        %v2773 = vpow.pop %v2772
        %v2774 = vmul.f32 %v2738, 1.442695
        %v2775 = vpow.pop %v2774
        %v2776 = vmul.f32 %v2739, 1.442695
        %v2777 = vpow.pop %v2776
        %v2778 = vmul.f32 %v2740, 1.442695
        %v2779 = vpow.pop %v2778
        %v2780 = vmul.f32 %v2741, 1.442695
        %v2781 = vpow.pop %v2780
        %v2782 = vmul.f32 %v2742, 1.442695
        %v2783 = vpow.pop %v2782
        %v2784 = vmul.f32 %v2743, 1.442695
        %v2785 = vpow.pop %v2784
        %v2786 = vmul.f32 %v2744, 1.442695
        %v2787 = vpow.pop %v2786
        %v2788 = vmul.f32 %v2745, 1.442695
        %v2789 = vpow.pop %v2788
        %v2790 = vmul.f32 %v2746, 1.442695
        %v2791 = vpow.pop %v2790
        %v2792 = vmul.f32 %v2747, 1.442695
        %v2793 = vpow.pop %v2792
        %v2794 = vmul.f32 %v2748, 1.442695
        %v2795 = vpow.pop %v2794
        %v2796 = vmul.f32 %v2749, 1.442695
        %v2797 = vpow.pop %v2796
        %v2798 = vmul.f32 %v2750, 1.442695
        %v2799 = vpow.pop %v2798
        %v2800 = vmul.f32 %v2751, 1.442695
        %v2801 = vpow.pop %v2800
        %v2802 = vmul.f32 %v2752, 1.442695
        %v2803 = vpow.pop %v2802
        %v2804 = vmul.f32 %v2753, 1.442695
        %v2805 = vpow.pop %v2804
        %v2806 = vmul.f32 %v2754, 1.442695
        %v2807 = vpow.pop %v2806
        %v2808 = vmul.f32 %v2755, 1.442695
        %v2809 = vpow.pop %v2808
        %v2810 = vmul.f32 %v2756, 1.442695
        %v2811 = vpow.pop %v2810
        %v2812 = vmul.f32 %v2757, 1.442695
        %v2813 = vpow.pop %v2812
        %v2814 = vmul.f32 %v2758, 1.442695
        %v2815 = vpow.pop %v2814
        %v2816 = vmul.f32 %v2759, 1.442695
        %v2817 = vpow.pop %v2816
        %v2818 = vmul.f32 %v2760, 1.442695
        %v2819 = vpow.pop %v2818
        %v2820 = vmul.f32 %v2761, 1.442695
        %v2821 = vpow.pop %v2820
        %v2822 = vmul.f32 %v2762, 1.442695
        %v2823 = vpow.pop %v2822
        %v2824 = vmul.f32 %v2763, 1.442695
        %v2825 = vpow.pop %v2824
        %v2826 = vmul.f32 %v2764, 1.442695
        %v2827 = vpow.pop %v2826
        %v2828 = vmul.f32 %v2765, 1.442695
        %v2829 = vpow.pop %v2828
        %v2830 = vadd.f32 %v2767, 1.0
        %v2831 = vadd.f32 %v2769, 1.0
        %v2832 = vadd.f32 %v2771, 1.0
        %v2833 = vadd.f32 %v2773, 1.0
        %v2834 = vadd.f32 %v2775, 1.0
        %v2835 = vadd.f32 %v2777, 1.0
        %v2836 = vadd.f32 %v2779, 1.0
        %v2837 = vadd.f32 %v2781, 1.0
        %v2838 = vadd.f32 %v2783, 1.0
        %v2839 = vadd.f32 %v2785, 1.0
        %v2840 = vadd.f32 %v2787, 1.0
        %v2841 = vadd.f32 %v2789, 1.0
        %v2842 = vadd.f32 %v2791, 1.0
        %v2843 = vadd.f32 %v2793, 1.0
        %v2844 = vadd.f32 %v2795, 1.0
        %v2845 = vadd.f32 %v2797, 1.0
        %v2846 = vadd.f32 %v2799, 1.0
        %v2847 = vadd.f32 %v2801, 1.0
        %v2848 = vadd.f32 %v2803, 1.0
        %v2849 = vadd.f32 %v2805, 1.0
        %v2850 = vadd.f32 %v2807, 1.0
        %v2851 = vadd.f32 %v2809, 1.0
        %v2852 = vadd.f32 %v2811, 1.0
        %v2853 = vadd.f32 %v2813, 1.0
        %v2854 = vadd.f32 %v2815, 1.0
        %v2855 = vadd.f32 %v2817, 1.0
        %v2856 = vadd.f32 %v2819, 1.0
        %v2857 = vadd.f32 %v2821, 1.0
        %v2858 = vadd.f32 %v2823, 1.0
        %v2859 = vadd.f32 %v2825, 1.0
        %v2860 = vadd.f32 %v2827, 1.0
        %v2861 = vadd.f32 %v2829, 1.0
        %v2862 = vrcp.pop %v2830
        %v2863 = vrcp.pop %v2831
        %v2864 = vrcp.pop %v2832
        %v2865 = vrcp.pop %v2833
        %v2866 = vrcp.pop %v2834
        %v2867 = vrcp.pop %v2835
        %v2868 = vrcp.pop %v2836
        %v2869 = vrcp.pop %v2837
        %v2870 = vrcp.pop %v2838
        %v2871 = vrcp.pop %v2839
        %v2872 = vrcp.pop %v2840
        %v2873 = vrcp.pop %v2841
        %v2874 = vrcp.pop %v2842
        %v2875 = vrcp.pop %v2843
        %v2876 = vrcp.pop %v2844
        %v2877 = vrcp.pop %v2845
        %v2878 = vrcp.pop %v2846
        %v2879 = vrcp.pop %v2847
        %v2880 = vrcp.pop %v2848
        %v2881 = vrcp.pop %v2849
        %v2882 = vrcp.pop %v2850
        %v2883 = vrcp.pop %v2851
        %v2884 = vrcp.pop %v2852
        %v2885 = vrcp.pop %v2853
        %v2886 = vrcp.pop %v2854
        %v2887 = vrcp.pop %v2855
        %v2888 = vrcp.pop %v2856
        %v2889 = vrcp.pop %v2857
        %v2890 = vrcp.pop %v2858
        %v2891 = vrcp.pop %v2859
        %v2892 = vrcp.pop %v2860
        %v2893 = vrcp.pop %v2861
        %v2894 = vmul.f32 %v2608, %v2862
        %v2895 = vmul.f32 %v2611, %v2863
        %v2896 = vmul.f32 %v2616, %v2864
        %v2897 = vmul.f32 %v2619, %v2865
        %v2898 = vmul.f32 %v2624, %v2866
        %v2899 = vmul.f32 %v2627, %v2867
        %v2900 = vmul.f32 %v2632, %v2868
        %v2901 = vmul.f32 %v2635, %v2869
        %v2902 = vmul.f32 %v2640, %v2870
        %v2903 = vmul.f32 %v2643, %v2871
        %v2904 = vmul.f32 %v2648, %v2872
        %v2905 = vmul.f32 %v2651, %v2873
        %v2906 = vmul.f32 %v2656, %v2874
        %v2907 = vmul.f32 %v2659, %v2875
        %v2908 = vmul.f32 %v2664, %v2876
        %v2909 = vmul.f32 %v2667, %v2877
        %v2910 = vmul.f32 %v2672, %v2878
        %v2911 = vmul.f32 %v2675, %v2879
        %v2912 = vmul.f32 %v2680, %v2880
        %v2913 = vmul.f32 %v2683, %v2881
        %v2914 = vmul.f32 %v2688, %v2882
        %v2915 = vmul.f32 %v2691, %v2883
        %v2916 = vmul.f32 %v2696, %v2884
        %v2917 = vmul.f32 %v2699, %v2885
        %v2918 = vmul.f32 %v2704, %v2886
        %v2919 = vmul.f32 %v2707, %v2887
        %v2920 = vmul.f32 %v2712, %v2888
        %v2921 = vmul.f32 %v2715, %v2889
        %v2922 = vmul.f32 %v2720, %v2890
        %v2923 = vmul.f32 %v2723, %v2891
        %v2924 = vmul.f32 %v2728, %v2892
        %v2925 = vmul.f32 %v2731, %v2893
        %v2926 = vpack.c.bf16 %v2895, %v2894
        %v2927 = vpack.c.bf16 %v2897, %v2896
        %v2928 = vpack.c.bf16 %v2899, %v2898
        %v2929 = vpack.c.bf16 %v2901, %v2900
        %v2930 = vpack.c.bf16 %v2903, %v2902
        %v2931 = vpack.c.bf16 %v2905, %v2904
        %v2932 = vpack.c.bf16 %v2907, %v2906
        %v2933 = vpack.c.bf16 %v2909, %v2908
        %v2934 = vpack.c.bf16 %v2911, %v2910
        %v2935 = vpack.c.bf16 %v2913, %v2912
        %v2936 = vpack.c.bf16 %v2915, %v2914
        %v2937 = vpack.c.bf16 %v2917, %v2916
        %v2938 = vpack.c.bf16 %v2919, %v2918
        %v2939 = vpack.c.bf16 %v2921, %v2920
        %v2940 = vpack.c.bf16 %v2923, %v2922
        %v2941 = vpack.c.bf16 %v2925, %v2924
        %v2958 = vunpack.c.l.b16 %v2926
        %v2959 = vunpack.c.h.b16 %v2926
        %v2960 = vunpack.c.l.b16 %v2927
        %v2961 = vunpack.c.h.b16 %v2927
        %v2962 = vunpack.c.l.b16 %v2928
        %v2963 = vunpack.c.h.b16 %v2928
        %v2964 = vunpack.c.l.b16 %v2929
        %v2965 = vunpack.c.h.b16 %v2929
        %v2966 = vunpack.c.l.b16 %v2930
        %v2967 = vunpack.c.h.b16 %v2930
        %v2968 = vunpack.c.l.b16 %v2931
        %v2969 = vunpack.c.h.b16 %v2931
        %v2970 = vunpack.c.l.b16 %v2932
        %v2971 = vunpack.c.h.b16 %v2932
        %v2972 = vunpack.c.l.b16 %v2933
        %v2973 = vunpack.c.h.b16 %v2933
        %v2974 = vunpack.c.l.b16 %v2934
        %v2975 = vunpack.c.h.b16 %v2934
        %v2976 = vunpack.c.l.b16 %v2935
        %v2977 = vunpack.c.h.b16 %v2935
        %v2978 = vunpack.c.l.b16 %v2936
        %v2979 = vunpack.c.h.b16 %v2936
        %v2980 = vunpack.c.l.b16 %v2937
        %v2981 = vunpack.c.h.b16 %v2937
        %v2982 = vunpack.c.l.b16 %v2938
        %v2983 = vunpack.c.h.b16 %v2938
        %v2984 = vunpack.c.l.b16 %v2939
        %v2985 = vunpack.c.h.b16 %v2939
        %v2986 = vunpack.c.l.b16 %v2940
        %v2987 = vunpack.c.h.b16 %v2940
        %v2988 = vunpack.c.l.b16 %v2941
        %v2989 = vunpack.c.h.b16 %v2941
        %v2990 = vpack.c.b16 %v2958, %v2958
        %v2991 = vpack.c.b16 %v2959, %v2959
        %v2992 = vpack.c.b16 %v2960, %v2960
        %v2993 = vpack.c.b16 %v2961, %v2961
        %v2994 = vpack.c.b16 %v2962, %v2962
        %v2995 = vpack.c.b16 %v2963, %v2963
        %v2996 = vpack.c.b16 %v2964, %v2964
        %v2997 = vpack.c.b16 %v2965, %v2965
        %v2998 = vpack.c.b16 %v2966, %v2966
        %v2999 = vpack.c.b16 %v2967, %v2967
        %v3000 = vpack.c.b16 %v2968, %v2968
        %v3001 = vpack.c.b16 %v2969, %v2969
        %v3002 = vpack.c.b16 %v2970, %v2970
        %v3003 = vpack.c.b16 %v2971, %v2971
        %v3004 = vpack.c.b16 %v2972, %v2972
        %v3005 = vpack.c.b16 %v2973, %v2973
        %v3006 = vpack.c.b16 %v2974, %v2974
        %v3007 = vpack.c.b16 %v2975, %v2975
        %v3008 = vpack.c.b16 %v2976, %v2976
        %v3009 = vpack.c.b16 %v2977, %v2977
        %v3010 = vpack.c.b16 %v2978, %v2978
        %v3011 = vpack.c.b16 %v2979, %v2979
        %v3012 = vpack.c.b16 %v2980, %v2980
        %v3013 = vpack.c.b16 %v2981, %v2981
        %v3014 = vpack.c.b16 %v2982, %v2982
        %v3015 = vpack.c.b16 %v2983, %v2983
        %v3016 = vpack.c.b16 %v2984, %v2984
        %v3017 = vpack.c.b16 %v2985, %v2985
        %v3018 = vpack.c.b16 %v2986, %v2986
        %v3019 = vpack.c.b16 %v2987, %v2987
        %v3020 = vpack.c.b16 %v2988, %v2988
        %v3021 = vpack.c.b16 %v2989, %v2989
        %3054 = vst [vmem:[%s263] sm:$0xf] %v2990
        %3055 = vst [vmem:[%s263 + $0x4] sm:$0xf] %v2991
        %3056 = vst [vmem:[%s263 + $0x8] sm:$0xf] %v2992
        %3057 = vst [vmem:[%s263 + $0xc] sm:$0xf] %v2993
        %3058 = vst [vmem:[%s263 + $0x10] sm:$0xf] %v2994
        %3059 = vst [vmem:[%s263 + $0x14] sm:$0xf] %v2995
        %3060 = vst [vmem:[%s263 + $0x18] sm:$0xf] %v2996
        %3061 = vst [vmem:[%s263 + $0x1c] sm:$0xf] %v2997
        %3062 = vst [vmem:[%s263 + $0x20] sm:$0xf] %v2998
        %3063 = vst [vmem:[%s263 + $0x24] sm:$0xf] %v2999
        %3064 = vst [vmem:[%s263 + $0x28] sm:$0xf] %v3000
        %3065 = vst [vmem:[%s263 + $0x2c] sm:$0xf] %v3001
        %3066 = vst [vmem:[%s263 + $0x30] sm:$0xf] %v3002
        %3067 = vst [vmem:[%s263 + $0x34] sm:$0xf] %v3003
        %3068 = vst [vmem:[%s263 + $0x38] sm:$0xf] %v3004
        %3069 = vst [vmem:[%s263 + $0x3c] sm:$0xf] %v3005
        %3070 = vst [vmem:[%s263 + $0x40] sm:$0xf] %v3006
        %3071 = vst [vmem:[%s263 + $0x44] sm:$0xf] %v3007
        %3072 = vst [vmem:[%s263 + $0x48] sm:$0xf] %v3008
        %3073 = vst [vmem:[%s263 + $0x4c] sm:$0xf] %v3009
        %3074 = vst [vmem:[%s263 + $0x50] sm:$0xf] %v3010
        %3075 = vst [vmem:[%s263 + $0x54] sm:$0xf] %v3011
        %3076 = vst [vmem:[%s263 + $0x58] sm:$0xf] %v3012
        %3077 = vst [vmem:[%s263 + $0x5c] sm:$0xf] %v3013
        %3078 = vst [vmem:[%s263 + $0x60] sm:$0xf] %v3014
        %3079 = vst [vmem:[%s263 + $0x64] sm:$0xf] %v3015
        %3080 = vst [vmem:[%s263 + $0x68] sm:$0xf] %v3016
        %3081 = vst [vmem:[%s263 + $0x6c] sm:$0xf] %v3017
        %3082 = vst [vmem:[%s263 + $0x70] sm:$0xf] %v3018
        %3083 = vst [vmem:[%s263 + $0x74] sm:$0xf] %v3019
        %3084 = vst [vmem:[%s263 + $0x78] sm:$0xf] %v3020
        %3085 = vst [vmem:[%s263 + $0x7c] sm:$0xf] %v3021
        %v3086 = vadd.f32 %v2894, %v2895
        %v3087 = vadd.f32 %v3086, %v2896
        %v3088 = vadd.f32 %v3087, %v2897
        %v3089 = vadd.f32 %v3088, %v2898
        %v3090 = vadd.f32 %v3089, %v2899
        %v3091 = vadd.f32 %v3090, %v2900
        %v3092 = vadd.f32 %v3091, %v2901
        %v3093 = vadd.f32 %v3092, %v2902
        %v3094 = vadd.f32 %v3093, %v2903
        %v3095 = vadd.f32 %v3094, %v2904
        %v3096 = vadd.f32 %v3095, %v2905
        %v3097 = vadd.f32 %v3096, %v2906
        %v3098 = vadd.f32 %v3097, %v2907
        %v3099 = vadd.f32 %v3098, %v2908
        %v3100 = vadd.f32 %v3099, %v2909
        %v3101 = vadd.f32 %v3100, %v2910
        %v3102 = vadd.f32 %v3101, %v2911
        %v3103 = vadd.f32 %v3102, %v2912
        %v3104 = vadd.f32 %v3103, %v2913
        %v3105 = vadd.f32 %v3104, %v2914
        %v3106 = vadd.f32 %v3105, %v2915
        %v3107 = vadd.f32 %v3106, %v2916
        %v3108 = vadd.f32 %v3107, %v2917
        %v3109 = vadd.f32 %v3108, %v2918
        %v3110 = vadd.f32 %v3109, %v2919
        %v3111 = vadd.f32 %v3110, %v2920
        %v3112 = vadd.f32 %v3111, %v2921
        %v3113 = vadd.f32 %v3112, %v2922
        %v3114 = vadd.f32 %v3113, %v2923
        %v3115 = vadd.f32 %v3114, %v2924
        %v3116 = vadd.f32 %v3115, %v2925
        %v3117 = vrot.slane %v3116, 4
        %v3118 = vadd.f32 %v3116, %v3117
        %v3119 = vrot.slane %v3118, 2
        %v3120 = vadd.f32 %v3118, %v3119
        %v3121 = vrot.slane %v3120, 1
        %v3122 = vadd.f32 %v3120, %v3121
        %3123 = vst [vmem:[%s269] sm:$0x1] %v3122
        %v3124 = vmul.f32 %v2894, %v2894
        %v3125 = vmul.f32 %v2895, %v2895
        %v3126 = vmul.f32 %v2896, %v2896
        %v3127 = vmul.f32 %v2897, %v2897
        %v3128 = vmul.f32 %v2898, %v2898
        %v3129 = vmul.f32 %v2899, %v2899
        %v3130 = vmul.f32 %v2900, %v2900
        %v3131 = vmul.f32 %v2901, %v2901
        %v3132 = vmul.f32 %v2902, %v2902
        %v3133 = vmul.f32 %v2903, %v2903
        %v3134 = vmul.f32 %v2904, %v2904
        %v3135 = vmul.f32 %v2905, %v2905
        %v3136 = vmul.f32 %v2906, %v2906
        %v3137 = vmul.f32 %v2907, %v2907
        %v3138 = vmul.f32 %v2908, %v2908
        %v3139 = vmul.f32 %v2909, %v2909
        %v3140 = vmul.f32 %v2910, %v2910
        %v3141 = vmul.f32 %v2911, %v2911
        %v3142 = vmul.f32 %v2912, %v2912
        %v3143 = vmul.f32 %v2913, %v2913
        %v3144 = vmul.f32 %v2914, %v2914
        %v3145 = vmul.f32 %v2915, %v2915
        %v3146 = vmul.f32 %v2916, %v2916
        %v3147 = vmul.f32 %v2917, %v2917
        %v3148 = vmul.f32 %v2918, %v2918
        %v3149 = vmul.f32 %v2919, %v2919
        %v3150 = vmul.f32 %v2920, %v2920
        %v3151 = vmul.f32 %v2921, %v2921
        %v3152 = vmul.f32 %v2922, %v2922
        %v3153 = vmul.f32 %v2923, %v2923
        %v3154 = vmul.f32 %v2924, %v2924
        %v3155 = vmul.f32 %v2925, %v2925
        %v3156 = vadd.f32 %v3124, %v3125
        %v3157 = vadd.f32 %v3156, %v3126
        %v3158 = vadd.f32 %v3157, %v3127
        %v3159 = vadd.f32 %v3158, %v3128
        %v3160 = vadd.f32 %v3159, %v3129
        %v3161 = vadd.f32 %v3160, %v3130
        %v3162 = vadd.f32 %v3161, %v3131
        %v3163 = vadd.f32 %v3162, %v3132
        %v3164 = vadd.f32 %v3163, %v3133
        %v3165 = vadd.f32 %v3164, %v3134
        %v3166 = vadd.f32 %v3165, %v3135
        %v3167 = vadd.f32 %v3166, %v3136
        %v3168 = vadd.f32 %v3167, %v3137
        %v3169 = vadd.f32 %v3168, %v3138
        %v3170 = vadd.f32 %v3169, %v3139
        %v3171 = vadd.f32 %v3170, %v3140
        %v3172 = vadd.f32 %v3171, %v3141
        %v3173 = vadd.f32 %v3172, %v3142
        %v3174 = vadd.f32 %v3173, %v3143
        %v3175 = vadd.f32 %v3174, %v3144
        %v3176 = vadd.f32 %v3175, %v3145
        %v3177 = vadd.f32 %v3176, %v3146
        %v3178 = vadd.f32 %v3177, %v3147
        %v3179 = vadd.f32 %v3178, %v3148
        %v3180 = vadd.f32 %v3179, %v3149
        %v3181 = vadd.f32 %v3180, %v3150
        %v3182 = vadd.f32 %v3181, %v3151
        %v3183 = vadd.f32 %v3182, %v3152
        %v3184 = vadd.f32 %v3183, %v3153
        %v3185 = vadd.f32 %v3184, %v3154
        %v3186 = vadd.f32 %v3185, %v3155
        %v3187 = vrot.slane %v3186, 4
        %v3188 = vadd.f32 %v3186, %v3187
        %v3189 = vrot.slane %v3188, 2
        %v3190 = vadd.f32 %v3188, %v3189
        %v3191 = vrot.slane %v3190, 1
        %v3192 = vadd.f32 %v3190, %v3191
        %3193 = vst [vmem:[%s275] sm:$0x1] %v3192
        %s3194 = sand.u32 %s123, 1
        %s3195 = scalar_lea.sflag [#allocation5], %s3194
        %s3196 = sand.u32 %s123, 1
        %s3197 = smul.addr %s3196, 128
        %s3198 = scalar_lea.vmem [#allocation4], %s3197
        %s3199 = sand.u32 %s23, 1
        %s3200 = scalar_lea.sflag [#allocation7], %s3199
        %s3201 = sand.u32 %s151, 1
        %s3202 = scalar_lea.vmem [#allocation6], %s3201
        %s3203 = sand.u32 %s23, 1
        %s3204 = scalar_lea.sflag [#allocation7], %s3203
        %s3205 = sand.u32 %s179, 1
        %s3206 = scalar_lea.vmem [#allocation8], %s3205
        // Predicated region
        $region37: #{tpu_custom_call.1} parent=31 // pred_check
          %p3207 = pneg %p133
        $region38: #{tpu_custom_call.1} parent=31 // pred_check_branch
          %3209 = sbr.rel (%p3207) target = $region40
        $region39: #{tpu_custom_call.1} parent=31 // pred_region
          %s3211 = ssub.s32 2048, 2048
          %3212 = vsyncadd %s3195, %s3211
          %s3213 = smul.addr %s27, 32
          %s3214 = sadd.s32 %s28, %s3213
          %s3215 = smul.addr %s3214, 64
          %s3216 = scalar_lea.hbm %s3, %s3215
          %s3217 = sshll.u32 %s3198, 4
          %s3218 = int_to_ptr.vmem [resolvable:$true] %s3217
          %3223 = dma.vmem_to_hbm [thread:$0]  %s3218, 2048, %s3216, %s3195, 64, 64, 4
        $region40: #{tpu_custom_call.1} parent=31 // pred_fallthru
          _
        // Predicated region
        $region41: #{tpu_custom_call.1} parent=31 // pred_check
          %p3224 = pneg %p161
        $region42: #{tpu_custom_call.1} parent=31 // pred_check_branch
          %3226 = sbr.rel (%p3224) target = $region44
        $region43: #{tpu_custom_call.1} parent=31 // pred_region
          %s3228 = ssub.s32 16, 16
          %3229 = vsyncadd %s3200, %s3228
          %s3230 = sadd.s32 %s28, %s27
          %s3231 = smul.addr %s3230, 16
          %s3232 = scalar_lea.hbm %s4, %s3231
          %s3234 = sshll.u32 %s3202, 4
          %s3235 = int_to_ptr.vmem [resolvable:$true] %s3234
          %3237 = dma.vmem_to_hbm [thread:$0]  %s3235, 16, %s3232, %s3200
        $region44: #{tpu_custom_call.1} parent=31 // pred_fallthru
          _
        // Predicated region
        $region45: #{tpu_custom_call.1} parent=31 // pred_check
          %p3238 = pneg %p189
        $region46: #{tpu_custom_call.1} parent=31 // pred_check_branch
          %3240 = sbr.rel (%p3238) target = $region48
        $region47: #{tpu_custom_call.1} parent=31 // pred_region
          %s3242 = ssub.s32 16, 16
          %3243 = vsyncadd %s3204, %s3242
          %s3244 = sadd.s32 %s28, %s27
          %s3245 = smul.addr %s3244, 16
          %s3246 = scalar_lea.hbm %s5, %s3245
          %s3248 = sshll.u32 %s3206, 4
          %s3249 = int_to_ptr.vmem [resolvable:$true] %s3248
          %3251 = dma.vmem_to_hbm [thread:$0]  %s3249, 16, %s3246, %s3204
        $region48: #{tpu_custom_call.1} parent=31 // pred_fallthru
          _
      $region32: #{tpu_custom_call.1} parent=5 // pred_fallthru
        _
      %p3252 = scmp.le.s32.totalorder 2, %s18
      // Predicated region
      $region49: #{tpu_custom_call.1} parent=5 // pred_check
        %p3253 = pneg %p3252
      $region50: #{tpu_custom_call.1} parent=5 // pred_check_branch
        %3255 = sbr.rel (%p3253) target = $region52
      $region51: #{tpu_custom_call.1} parent=5 // pred_region
        %s3256 = ssub.s32 %s18, 2
        // Predicated region
        $region53: #{tpu_custom_call.1} parent=51 // pred_check
          %p3257 = pneg %p139
        $region54: #{tpu_custom_call.1} parent=51 // pred_check_branch
          %3259 = sbr.rel (%p3257) target = $region56
        $region55: #{tpu_custom_call.1} parent=51 // pred_region
          %s3260 = sand.u32 %s124, 1
          %s3261 = scalar_lea.sflag [#allocation5], %s3260
          %s3262 = sand.u32 %s124, 1
          %s3263 = smul.addr %s3262, 128
          %s3264 = scalar_lea.vmem [#allocation4], %s3263
          %3265 = dma.done %s3261, 2048
        $region56: #{tpu_custom_call.1} parent=51 // pred_fallthru
          _
        // Predicated region
        $region57: #{tpu_custom_call.1} parent=51 // pred_check
          %p3266 = pneg %p167
        $region58: #{tpu_custom_call.1} parent=51 // pred_check_branch
          %3268 = sbr.rel (%p3266) target = $region60
        $region59: #{tpu_custom_call.1} parent=51 // pred_region
          %s3269 = sand.u32 %s24, 1
          %s3270 = scalar_lea.sflag [#allocation7], %s3269
          %s3271 = sand.u32 %s152, 1
          %s3272 = scalar_lea.vmem [#allocation6], %s3271
          %3273 = dma.done %s3270, 16
        $region60: #{tpu_custom_call.1} parent=51 // pred_fallthru
          _
        // Predicated region
        $region61: #{tpu_custom_call.1} parent=51 // pred_check
          %p3274 = pneg %p195
        $region62: #{tpu_custom_call.1} parent=51 // pred_check_branch
          %3276 = sbr.rel (%p3274) target = $region64
        $region63: #{tpu_custom_call.1} parent=51 // pred_region
          %s3277 = sand.u32 %s24, 1
          %s3278 = scalar_lea.sflag [#allocation7], %s3277
          %s3279 = sand.u32 %s180, 1
          %s3280 = scalar_lea.vmem [#allocation8], %s3279
          %3281 = dma.done %s3278, 16
        $region64: #{tpu_custom_call.1} parent=51 // pred_fallthru
          _
      $region52: #{tpu_custom_call.1} parent=5 // pred_fallthru
        _
    $region6: #{tpu_custom_call.1} parent=1 // loop_footer
      %s22 = sadd.s32 1, %s18
    $region7: #{tpu_custom_call.1} parent=1 // loop_footer_branch
      %17 = sbr.rel target = $region3
    $region8: #{tpu_custom_call.1} parent=1 // loop_exit
      _
    %3282 = vsyncpa [#allocation5], 1
    %s3283 = scalar_lea.sflag [#allocation5], 1
    %3284 = vsyncpa %s3283, 1
    %3285 = vsyncpa [#allocation7], 1
    %s3286 = scalar_lea.sflag [#allocation7], 1
    %3287 = vsyncpa %s3286, 1

</llo_original>
